<compile_context>
chip_gen: v5e
topology: v5e:2x2
jax: 0.10.0
libtpu: 0.0.40
codegen_flags: <defaults>
</compile_context>

<pallas_src>
import functools

import jax
import jax.numpy as jnp
from jax import lax
from jax.experimental import pallas as pl
from jax.experimental.pallas import tpu as pltpu

PRIMITIVES_DOWN = ("none", "max_pool_3x3", "skip_connect", "conv_3x3")
PRIMITIVES_UP = ("none_up", "up_nearest", "up_conv_3x3")
_BN_EPS = 1e-5
_NEG = -1.0e30     # border pad: behaves like -inf for max-pool, relu() -> 0 for conv


def channel_shuffle(x, groups):
    b, c, h, w = x.shape
    x = x.reshape(b, groups, c // groups, h, w)
    x = jnp.transpose(x, (0, 2, 1, 3, 4))
    return x.reshape(b, c, h, w)


# ---------------------------------------------------------------------------
# Fused Pallas kernel: (ReLU -> im2col in VMEM -> one wide bf16 matmul ->
# BN + arch-weighted sum) + fused max_pool_3x3 + identity branch.
# ---------------------------------------------------------------------------
def _make_mixed_core(n, ho, wo, cq, n_src, tap_plan, gstride, n_groups,
                     pool_arch, ident_arch, in_bytes, npad):
    """Build the pallas_call for one static MixedOp configuration.

    tap_plan   : 9 tuples (src_idx, row_off, col_off) -> contiguous patch slices.
    gstride    : lane stride between conv-primitive column groups (multiple of 128).
    n_groups   : number of conv-style primitives packed into the matmul N axis.
    pool_arch  : arch index of max_pool_3x3 (pool+BN fused in kernel), or None.
    ident_arch : arch index of the identity / up_nearest branch (uses the raw
                 centre tap of the f32 source), or None.
    """
    m = n * ho * wo

    def kernel(*refs):
        w_ref = refs[0]                       # (P,) f32 arch weights in SMEM
        colw_ref = refs[1]                    # (1, NPAD) f32 per-column arch weight
        srcs = refs[2:2 + n_src]              # padded / phase-split activations
        wmat_ref = refs[2 + n_src]            # (9*Cq, NPAD) bf16 combined weights
        o_ref = refs[3 + n_src]

        src_vals = [s[...] for s in srcs]
        # Raw im2col taps (contiguous static slices only, built in VMEM/vregs).
        taps_raw = [src_vals[si][:, ro:ro + ho, co:co + wo, :].reshape(m, cq)
                    for (si, ro, co) in tap_plan]

        # Conv path: ReLU + bf16 cast per tap BEFORE the lane concat (half-size
        # temporary), then ONE wide matmul over every conv-based primitive.
        cols = jnp.concatenate(
            [jnp.maximum(t, 0.0).astype(jnp.bfloat16) for t in taps_raw], axis=-1)
        conv = jnp.dot(cols, wmat_ref[...],
                       preferred_element_type=jnp.float32)        # [M, NPAD] f32

        # Fused BatchNorm2d(affine=False, batch stats) with shifted (two-pass)
        # variance; the architecture weight is folded into the per-column
        # normalization vector so no non-lane-aligned scalar-scaled slices.
        mu = jnp.mean(conv, axis=0, keepdims=True)
        d = conv - mu
        var = jnp.mean(d * d, axis=0, keepdims=True)
        yw = d * (colw_ref[...] * lax.rsqrt(var + _BN_EPS))        # [M, NPAD]

        # Sum the conv-primitive column groups (each group starts at a
        # 128-aligned lane offset).
        res = yw[:, 0:cq]
        for g in range(1, n_groups):
            res = res + yw[:, g * gstride:g * gstride + cq]

        # max_pool_3x3 -> BN(affine=False), fused from the same raw taps.
        if pool_arch is not None:
            p = taps_raw[0]
            for t in taps_raw[1:]:
                p = jnp.maximum(p, t)
            p = p.astype(jnp.float32)
            pmu = jnp.mean(p, axis=0, keepdims=True)
            pd = p - pmu
            pvar = jnp.mean(pd * pd, axis=0, keepdims=True)
            res = res + w_ref[pool_arch] * pd * lax.rsqrt(pvar + _BN_EPS)

        # Identity / up_nearest branch: raw centre tap (exact f32 source).
        if ident_arch is not None:
            res = res + w_ref[ident_arch] * taps_raw[4].astype(jnp.float32)

        # TODO(synk): at production Cq, emit a lane-dense (n*ho, wo*cq) output
        # slab and add an M-axis grid + two-pass BN instead of this single block.
        o_ref[...] = res

    out_bytes = m * cq * 4
    cols_bytes = m * 9 * cq * 2
    conv_bytes = m * npad * 4
    ws = in_bytes + out_bytes + cols_bytes + conv_bytes
    vmem_limit = int(min(64 << 20, max(32 << 20, 3 * ws + (4 << 20))))

    cost = pl.CostEstimate(flops=2 * m * (9 * cq) * npad,
                           transcendentals=npad + cq,
                           bytes_accessed=in_bytes + out_bytes)

    in_specs = ([pl.BlockSpec(memory_space=pltpu.MemorySpace.SMEM)] +
                [pl.BlockSpec(memory_space=pltpu.MemorySpace.VMEM)] * (2 + n_src))
    return pl.pallas_call(
        kernel,
        out_shape=jax.ShapeDtypeStruct((m, cq), jnp.float32),
        in_specs=in_specs,
        out_specs=pl.BlockSpec(memory_space=pltpu.MemorySpace.VMEM),
        compiler_params=pltpu.CompilerParams(vmem_limit_bytes=vmem_limit),
        cost_estimate=cost,
    )


# ---------------------------------------------------------------------------
# MixedOp forward (Pallas path)
# ---------------------------------------------------------------------------
def mixed_op_pallas(x, arch_w, params, *, cell_class, stride):
    n, c, h, w = x.shape
    cq = c // 4
    xtemp = x[:, :cq]
    xtemp2 = x[:, cq:]
    xt = jnp.transpose(xtemp, (0, 2, 3, 1)).astype(jnp.float32)        # NHWC

    gstride = max(128, ((cq + 127) // 128) * 128)

    if cell_class == -1:                                               # down cell
        pool_arch = 1
        if stride == 2:
            ho, wo = h // 2, w // 2
            # Space-to-depth phase split so every in-kernel patch read is a
            # contiguous slice.  No branch needs exact f32 raws here, so the
            # sources go to the kernel in bf16 (half the input DMA bytes).
            srcs = [jnp.pad(xt[:, ph::2, pw::2, :],
                            ((0, 0), (1, 0), (1, 0), (0, 0)),
                            constant_values=_NEG).astype(jnp.bfloat16)
                    for ph in (0, 1) for pw in (0, 1)]
            off = {0: (1, 0), 1: (0, 1), 2: (1, 1)}   # conv tap -> (phase, offset)
            tap_plan = tuple((off[dh][0] * 2 + off[dw][0], off[dh][1], off[dw][1])
                             for dh in range(3) for dw in range(3))
            n_groups = 2
            npad = n_groups * gstride
            # Combined weights: group 0 = conv_3x3, group 1 = FactorizedReduce.
            w3 = jnp.transpose(params["conv3_w"], (2, 3, 1, 0)).reshape(9 * cq, cq)
            wmat = jnp.zeros((9 * cq, npad), jnp.float32)
            wmat = wmat.at[:, :cq].set(w3)
            wmat = wmat.at[4 * cq:5 * cq, gstride:gstride + cq // 2].set(
                params["fr_w1"][:, :, 0, 0].T)
            wmat = wmat.at[8 * cq:9 * cq, gstride + cq // 2:gstride + cq].set(
                params["fr_w2"][:, :, 0, 0].T)
            colw = jnp.zeros((1, npad), jnp.float32)
            colw = colw.at[0, :cq].set(arch_w[3])
            colw = colw.at[0, gstride:gstride + cq].set(arch_w[2])
            ident_arch = None
        else:
            ho, wo = h, w
            # Keep a single f32 source: pool and identity branches stay exact.
            srcs = [jnp.pad(xt, ((0, 0), (1, 1), (1, 1), (0, 0)),
                            constant_values=_NEG)]
            tap_plan = tuple((0, dh, dw) for dh in range(3) for dw in range(3))
            n_groups = 1
            npad = gstride
            w3 = jnp.transpose(params["conv3_w"], (2, 3, 1, 0)).reshape(9 * cq, cq)
            wmat = jnp.zeros((9 * cq, npad), jnp.float32).at[:, :cq].set(w3)
            colw = jnp.zeros((1, npad), jnp.float32).at[0, :cq].set(arch_w[3])
            ident_arch = 2                              # skip_connect == Identity
    else:                                                              # up cell
        pool_arch = None
        if stride == 2:
            xt = jnp.repeat(jnp.repeat(xt, 2, axis=1), 2, axis=2)
        ho, wo = xt.shape[1], xt.shape[2]
        srcs = [jnp.pad(xt, ((0, 0), (1, 1), (1, 1), (0, 0)))]         # f32
        tap_plan = tuple((0, dh, dw) for dh in range(3) for dw in range(3))
        n_groups = 1
        npad = gstride
        wu = jnp.transpose(params["upconv_w"], (2, 3, 1, 0)).reshape(9 * cq, cq)
        wmat = jnp.zeros((9 * cq, npad), jnp.float32).at[:, :cq].set(wu)
        colw = jnp.zeros((1, npad), jnp.float32).at[0, :cq].set(arch_w[2])
        ident_arch = 1                                  # up_nearest (raw values)

    wmat = wmat.astype(jnp.bfloat16)
    colw = colw.astype(jnp.float32)
    arch_f = arch_w.astype(jnp.float32)

    in_bytes = int(sum(int(s.size) * s.dtype.itemsize for s in srcs)
                   + wmat.size * 2 + colw.size * 4 + arch_f.size * 4)
    core = _make_mixed_core(n, ho, wo, cq, len(srcs), tap_plan, gstride,
                            n_groups, pool_arch, ident_arch, in_bytes, npad)
    temp1 = core(arch_f, colw, *srcs, wmat).reshape(n, ho, wo, cq)
    temp1 = jnp.transpose(temp1, (0, 3, 1, 2))                          # NCHW

    # Second branch on the remaining 3/4 of the channels + channel shuffle.
    if ho == h:
        x2 = xtemp2
    elif ho < h:
        x2 = lax.reduce_window(xtemp2, -jnp.inf, lax.max,
                               (1, 1, 2, 2), (1, 1, 2, 2), ((0, 0),) * 4)
    else:
        x2 = jnp.repeat(jnp.repeat(xtemp2, 2, axis=2), 2, axis=3)
    ans = jnp.concatenate([temp1, x2], axis=1)
    return channel_shuffle(ans, 4)


# ---------------------------------------------------------------------------
# Pure-JAX reference (same math; conv operands rounded to bf16 to mirror the
# kernel's MXU precision, accumulation in f32).
# ---------------------------------------------------------------------------
def _round_bf16(a):
    return a.astype(jnp.bfloat16).astype(jnp.float32)


def _bn_ref(x):
    m = jnp.mean(x, axis=(0, 2, 3), keepdims=True)
    v = jnp.var(x, axis=(0, 2, 3), keepdims=True)
    return (x - m) / jnp.sqrt(v + _BN_EPS)


def _conv_ref(x, w, stride, padding):
    return lax.conv_general_dilated(
        x, w, (stride, stride), ((padding, padding), (padding, padding)),
        dimension_numbers=("NCHW", "OIHW", "NCHW"),
        precision=lax.Precision.HIGHEST)


def _maxpool_ref(x, k, stride, padding):
    return lax.reduce_window(x, -jnp.inf, lax.max, (1, 1, k, k),
                             (1, 1, stride, stride),
                             ((0, 0), (0, 0), (padding, padding), (padding, padding)))


def mixed_op_reference(x, arch_w, params, *, cell_class, stride):
    n, c, h, w = x.shape
    cq = c // 4
    xtemp = x[:, :cq]
    xtemp2 = x[:, cq:]
    if cell_class == -1:
        xr = _round_bf16(jnp.maximum(xtemp, 0.0))
        # stride-2 path reads bf16 sources in the kernel -> mirror for the pool.
        pool_in = _round_bf16(xtemp) if stride == 2 else xtemp
        pool = _bn_ref(_maxpool_ref(pool_in, 3, stride, 1))
        conv3 = _bn_ref(_conv_ref(xr, _round_bf16(params["conv3_w"]), stride, 1))
        if stride == 1:
            skip = xtemp
        else:
            o1 = _conv_ref(xr, _round_bf16(params["fr_w1"]), 2, 0)
            o2 = _conv_ref(xr[:, :, 1:, 1:], _round_bf16(params["fr_w2"]), 2, 0)
            skip = _bn_ref(jnp.concatenate([o1, o2], axis=1))
        temp1 = arch_w[1] * pool + arch_w[2] * skip + arch_w[3] * conv3
    else:
        up = xtemp if stride == 1 else jnp.repeat(jnp.repeat(xtemp, 2, 2), 2, 3)
        xru = _round_bf16(jnp.maximum(up, 0.0))
        conv = _bn_ref(_conv_ref(xru, _round_bf16(params["upconv_w"]), 1, 1))
        temp1 = arch_w[1] * up + arch_w[2] * conv
    if temp1.shape[2] == h:
        x2 = xtemp2
    elif temp1.shape[2] < h:
        x2 = _maxpool_ref(xtemp2, 2, 2, 0)
    else:
        x2 = jnp.repeat(jnp.repeat(xtemp2, 2, 2), 2, 3)
    ans = jnp.concatenate([temp1, x2], axis=1)
    return channel_shuffle(ans, 4)


# ---------------------------------------------------------------------------
if __name__ == "__main__":
    N, C, H, W = 2, 16, 16, 16
    Cq = C // 4
    key = jax.random.PRNGKey(0)
    ks = jax.random.split(key, 8)
    x = jax.random.normal(ks[0], (N, C, H, W), jnp.float32)

    params_down = {
        "conv3_w": 0.3 * jax.random.normal(ks[1], (Cq, Cq, 3, 3), jnp.float32),
        "fr_w1": 0.3 * jax.random.normal(ks[2], (Cq // 2, Cq, 1, 1), jnp.float32),
        "fr_w2": 0.3 * jax.random.normal(ks[3], (Cq // 2, Cq, 1, 1), jnp.float32),
    }
    params_up = {
        "upconv_w": 0.3 * jax.random.normal(ks[4], (Cq, Cq, 3, 3), jnp.float32),
    }
    w_down = jax.nn.softmax(0.2 * jax.random.normal(ks[5], (len(PRIMITIVES_DOWN),)))
    w_up = jax.nn.softmax(0.2 * jax.random.normal(ks[6], (len(PRIMITIVES_UP),)))

    cases = [
        ("down_stride2", -1, 2, params_down, w_down, (N, C, H // 2, W // 2)),
        ("down_stride1", -1, 1, params_down, w_down, (N, C, H, W)),
        ("up_stride2", 1, 2, params_up, w_up, (N, C, 2 * H, 2 * W)),
    ]
    for name, cc, s, p, aw, expected in cases:
        fwd = jax.jit(functools.partial(mixed_op_pallas, cell_class=cc, stride=s))
        out = jax.block_until_ready(fwd(x, aw, p))
        ref = mixed_op_reference(x, aw, p, cell_class=cc, stride=s)
        assert out.shape == expected, (name, out.shape)
        assert bool(jnp.all(jnp.isfinite(out))), name
        err = float(jnp.max(jnp.abs(out - ref)))
        assert err < 1e-2, (name, err)

    print("KERNEL_OK")
</pallas_src>

<mosaic_0001>
module attributes {stable_mosaic.version = 11 : i64} {
  func.func @kernel(%arg0: memref<4xf32, #tpu.memory_space<smem>>, %arg1: memref<1x256xf32, #tpu.memory_space<vmem>>, %arg2: memref<2x9x9x4xbf16, #tpu.memory_space<vmem>>, %arg3: memref<2x9x9x4xbf16, #tpu.memory_space<vmem>>, %arg4: memref<2x9x9x4xbf16, #tpu.memory_space<vmem>>, %arg5: memref<2x9x9x4xbf16, #tpu.memory_space<vmem>>, %arg6: memref<36x256xbf16, #tpu.memory_space<vmem>>, %arg7: memref<128x4xf32, #tpu.memory_space<vmem>>) attributes {dimension_semantics = [], scalar_prefetch = 0 : i64, scratch_operands = 0 : i64, tpu.core_type = #tpu.core_type<tc>} {
    %c0 = arith.constant 0 : index
    %c0_0 = arith.constant 0 : index
    %c0_1 = arith.constant 0 : index
    %c0_2 = arith.constant 0 : index
    %0 = vector.load %arg2[%c0, %c0_0, %c0_1, %c0_2] : memref<2x9x9x4xbf16, #tpu.memory_space<vmem>>, vector<2x9x9x4xbf16>
    %c0_3 = arith.constant 0 : index
    %c0_4 = arith.constant 0 : index
    %c0_5 = arith.constant 0 : index
    %c0_6 = arith.constant 0 : index
    %1 = vector.load %arg3[%c0_3, %c0_4, %c0_5, %c0_6] : memref<2x9x9x4xbf16, #tpu.memory_space<vmem>>, vector<2x9x9x4xbf16>
    %c0_7 = arith.constant 0 : index
    %c0_8 = arith.constant 0 : index
    %c0_9 = arith.constant 0 : index
    %c0_10 = arith.constant 0 : index
    %2 = vector.load %arg4[%c0_7, %c0_8, %c0_9, %c0_10] : memref<2x9x9x4xbf16, #tpu.memory_space<vmem>>, vector<2x9x9x4xbf16>
    %c0_11 = arith.constant 0 : index
    %c0_12 = arith.constant 0 : index
    %c0_13 = arith.constant 0 : index
    %c0_14 = arith.constant 0 : index
    %3 = vector.load %arg5[%c0_11, %c0_12, %c0_13, %c0_14] : memref<2x9x9x4xbf16, #tpu.memory_space<vmem>>, vector<2x9x9x4xbf16>
    %4 = vector.extract_strided_slice %3 {offsets = [0, 0, 0, 0], sizes = [2, 8, 8, 4], strides = [1, 1, 1, 1]} : vector<2x9x9x4xbf16> to vector<2x8x8x4xbf16>
    %5 = vector.shape_cast %4 : vector<2x8x8x4xbf16> to vector<128x4xbf16>
    %6 = vector.extract_strided_slice %2 {offsets = [0, 0, 1, 0], sizes = [2, 8, 8, 4], strides = [1, 1, 1, 1]} : vector<2x9x9x4xbf16> to vector<2x8x8x4xbf16>
    %7 = vector.shape_cast %6 : vector<2x8x8x4xbf16> to vector<128x4xbf16>
    %8 = vector.extract_strided_slice %3 {offsets = [0, 0, 1, 0], sizes = [2, 8, 8, 4], strides = [1, 1, 1, 1]} : vector<2x9x9x4xbf16> to vector<2x8x8x4xbf16>
    %9 = vector.shape_cast %8 : vector<2x8x8x4xbf16> to vector<128x4xbf16>
    %10 = vector.extract_strided_slice %1 {offsets = [0, 1, 0, 0], sizes = [2, 8, 8, 4], strides = [1, 1, 1, 1]} : vector<2x9x9x4xbf16> to vector<2x8x8x4xbf16>
    %11 = vector.shape_cast %10 : vector<2x8x8x4xbf16> to vector<128x4xbf16>
    %12 = vector.extract_strided_slice %0 {offsets = [0, 1, 1, 0], sizes = [2, 8, 8, 4], strides = [1, 1, 1, 1]} : vector<2x9x9x4xbf16> to vector<2x8x8x4xbf16>
    %13 = vector.shape_cast %12 : vector<2x8x8x4xbf16> to vector<128x4xbf16>
    %14 = vector.extract_strided_slice %1 {offsets = [0, 1, 1, 0], sizes = [2, 8, 8, 4], strides = [1, 1, 1, 1]} : vector<2x9x9x4xbf16> to vector<2x8x8x4xbf16>
    %15 = vector.shape_cast %14 : vector<2x8x8x4xbf16> to vector<128x4xbf16>
    %16 = vector.extract_strided_slice %3 {offsets = [0, 1, 0, 0], sizes = [2, 8, 8, 4], strides = [1, 1, 1, 1]} : vector<2x9x9x4xbf16> to vector<2x8x8x4xbf16>
    %17 = vector.shape_cast %16 : vector<2x8x8x4xbf16> to vector<128x4xbf16>
    %18 = vector.extract_strided_slice %2 {offsets = [0, 1, 1, 0], sizes = [2, 8, 8, 4], strides = [1, 1, 1, 1]} : vector<2x9x9x4xbf16> to vector<2x8x8x4xbf16>
    %19 = vector.shape_cast %18 : vector<2x8x8x4xbf16> to vector<128x4xbf16>
    %20 = vector.extract_strided_slice %3 {offsets = [0, 1, 1, 0], sizes = [2, 8, 8, 4], strides = [1, 1, 1, 1]} : vector<2x9x9x4xbf16> to vector<2x8x8x4xbf16>
    %21 = vector.shape_cast %20 : vector<2x8x8x4xbf16> to vector<128x4xbf16>
    %cst = arith.constant 0.000000e+00 : bf16
    %22 = vector.broadcast %cst : bf16 to vector<128x4xbf16>
    %23 = arith.maximumf %5, %22 : vector<128x4xbf16>
    %cst_15 = arith.constant 0.000000e+00 : bf16
    %24 = vector.broadcast %cst_15 : bf16 to vector<128x4xbf16>
    %25 = arith.maximumf %7, %24 : vector<128x4xbf16>
    %cst_16 = arith.constant 0.000000e+00 : bf16
    %26 = vector.broadcast %cst_16 : bf16 to vector<128x4xbf16>
    %27 = arith.maximumf %9, %26 : vector<128x4xbf16>
    %cst_17 = arith.constant 0.000000e+00 : bf16
    %28 = vector.broadcast %cst_17 : bf16 to vector<128x4xbf16>
    %29 = arith.maximumf %11, %28 : vector<128x4xbf16>
    %cst_18 = arith.constant 0.000000e+00 : bf16
    %30 = vector.broadcast %cst_18 : bf16 to vector<128x4xbf16>
    %31 = arith.maximumf %13, %30 : vector<128x4xbf16>
    %cst_19 = arith.constant 0.000000e+00 : bf16
    %32 = vector.broadcast %cst_19 : bf16 to vector<128x4xbf16>
    %33 = arith.maximumf %15, %32 : vector<128x4xbf16>
    %cst_20 = arith.constant 0.000000e+00 : bf16
    %34 = vector.broadcast %cst_20 : bf16 to vector<128x4xbf16>
    %35 = arith.maximumf %17, %34 : vector<128x4xbf16>
    %cst_21 = arith.constant 0.000000e+00 : bf16
    %36 = vector.broadcast %cst_21 : bf16 to vector<128x4xbf16>
    %37 = arith.maximumf %19, %36 : vector<128x4xbf16>
    %cst_22 = arith.constant 0.000000e+00 : bf16
    %38 = vector.broadcast %cst_22 : bf16 to vector<128x4xbf16>
    %39 = arith.maximumf %21, %38 : vector<128x4xbf16>
    %40 = tpu.concatenate %23, %25, %27, %29, %31, %33, %35, %37, %39 in 1 : vector<128x4xbf16>, vector<128x4xbf16>, vector<128x4xbf16>, vector<128x4xbf16>, vector<128x4xbf16>, vector<128x4xbf16>, vector<128x4xbf16>, vector<128x4xbf16>, vector<128x4xbf16> -> vector<128x36xbf16>
    %c0_23 = arith.constant 0 : index
    %c0_24 = arith.constant 0 : index
    %41 = vector.load %arg6[%c0_23, %c0_24] : memref<36x256xbf16, #tpu.memory_space<vmem>>, vector<36x256xbf16>
    %cst_25 = arith.constant dense<0.000000e+00> : vector<128x256xf32>
    %42 = tpu.matmul %40, %41, %cst_25 {dimension_numbers = #tpu.dot_dimension_numbers<[1], [0], [0], [1], [0, 0, 1, 1], [], []>} : vector<128x36xbf16>, vector<36x256xbf16>, vector<128x256xf32> -> vector<128x256xf32>
    %cst_26 = arith.constant dense<0.000000e+00> : vector<256xf32>
    %43 = vector.multi_reduction <add>, %42, %cst_26 [0] : vector<128x256xf32> to vector<256xf32>
    %44 = vector.shape_cast %43 : vector<256xf32> to vector<1x256xf32>
    %cst_27 = arith.constant 1.280000e+02 : f32
    %45 = vector.broadcast %cst_27 : f32 to vector<1x256xf32>
    %46 = arith.divf %44, %45 : vector<1x256xf32>
    %47 = vector.broadcast %46 : vector<1x256xf32> to vector<128x256xf32>
    %48 = arith.subf %42, %47 : vector<128x256xf32>
    %49 = arith.mulf %48, %48 : vector<128x256xf32>
    %cst_28 = arith.constant dense<0.000000e+00> : vector<256xf32>
    %50 = vector.multi_reduction <add>, %49, %cst_28 [0] : vector<128x256xf32> to vector<256xf32>
    %51 = vector.shape_cast %50 : vector<256xf32> to vector<1x256xf32>
    %cst_29 = arith.constant 1.280000e+02 : f32
    %52 = vector.broadcast %cst_29 : f32 to vector<1x256xf32>
    %53 = arith.divf %51, %52 : vector<1x256xf32>
    %c0_30 = arith.constant 0 : index
    %c0_31 = arith.constant 0 : index
    %54 = vector.load %arg1[%c0_30, %c0_31] : memref<1x256xf32, #tpu.memory_space<vmem>>, vector<1x256xf32>
    %cst_32 = arith.constant 9.99999974E-6 : f32
    %55 = vector.broadcast %cst_32 : f32 to vector<1x256xf32>
    %56 = arith.addf %53, %55 : vector<1x256xf32>
    %57 = math.rsqrt %56 : vector<1x256xf32>
    %58 = arith.mulf %54, %57 : vector<1x256xf32>
    %59 = vector.broadcast %58 : vector<1x256xf32> to vector<128x256xf32>
    %60 = arith.mulf %48, %59 : vector<128x256xf32>
    %61 = vector.extract_strided_slice %60 {offsets = [0, 0], sizes = [128, 4], strides = [1, 1]} : vector<128x256xf32> to vector<128x4xf32>
    %62 = vector.extract_strided_slice %60 {offsets = [0, 128], sizes = [128, 4], strides = [1, 1]} : vector<128x256xf32> to vector<128x4xf32>
    %63 = arith.addf %61, %62 : vector<128x4xf32>
    %64 = arith.maximumf %5, %7 : vector<128x4xbf16>
    %65 = arith.maximumf %64, %9 : vector<128x4xbf16>
    %66 = arith.maximumf %65, %11 : vector<128x4xbf16>
    %67 = arith.maximumf %66, %13 : vector<128x4xbf16>
    %68 = arith.maximumf %67, %15 : vector<128x4xbf16>
    %69 = arith.maximumf %68, %17 : vector<128x4xbf16>
    %70 = arith.maximumf %69, %19 : vector<128x4xbf16>
    %71 = arith.maximumf %70, %21 : vector<128x4xbf16>
    %72 = arith.extf %71 : vector<128x4xbf16> to vector<128x4xf32>
    %cst_33 = arith.constant dense<0.000000e+00> : vector<4xf32>
    %73 = vector.multi_reduction <add>, %72, %cst_33 [0] : vector<128x4xf32> to vector<4xf32>
    %74 = vector.shape_cast %73 : vector<4xf32> to vector<1x4xf32>
    %cst_34 = arith.constant 1.280000e+02 : f32
    %75 = vector.broadcast %cst_34 : f32 to vector<1x4xf32>
    %76 = arith.divf %74, %75 : vector<1x4xf32>
    %77 = vector.broadcast %76 : vector<1x4xf32> to vector<128x4xf32>
    %78 = arith.subf %72, %77 : vector<128x4xf32>
    %79 = arith.mulf %78, %78 : vector<128x4xf32>
    %cst_35 = arith.constant dense<0.000000e+00> : vector<4xf32>
    %80 = vector.multi_reduction <add>, %79, %cst_35 [0] : vector<128x4xf32> to vector<4xf32>
    %81 = vector.shape_cast %80 : vector<4xf32> to vector<1x4xf32>
    %cst_36 = arith.constant 1.280000e+02 : f32
    %82 = vector.broadcast %cst_36 : f32 to vector<1x4xf32>
    %83 = arith.divf %81, %82 : vector<1x4xf32>
    %c1 = arith.constant 1 : index
    %84 = memref.load %arg0[%c1] : memref<4xf32, #tpu.memory_space<smem>>
    %85 = vector.broadcast %84 : f32 to vector<128x4xf32>
    %86 = arith.mulf %85, %78 : vector<128x4xf32>
    %cst_37 = arith.constant 9.99999974E-6 : f32
    %87 = vector.broadcast %cst_37 : f32 to vector<1x4xf32>
    %88 = arith.addf %83, %87 : vector<1x4xf32>
    %89 = math.rsqrt %88 : vector<1x4xf32>
    %90 = vector.broadcast %89 : vector<1x4xf32> to vector<128x4xf32>
    %91 = arith.mulf %86, %90 : vector<128x4xf32>
    %92 = arith.addf %63, %91 : vector<128x4xf32>
    %c0_38 = arith.constant 0 : index
    %c0_39 = arith.constant 0 : index
    %93 = vector.load %arg7[%c0_38, %c0_39] : memref<128x4xf32, #tpu.memory_space<vmem>>, vector<128x4xf32>
    tpu.vector_store %arg7[%c0_38, %c0_39], %92 {strides = array<i32>} : memref<128x4xf32, #tpu.memory_space<vmem>>, vector<128x4xf32>,
    return
  }
}

</mosaic_0001>

<llo_original>
// kernel: mixed_op_pallas.1
$region0: #{mixed_op_pallas.1}
  #allocation0 [shape = 'u32[]', space=smem, size = 0x4, offset = 0x4, fixed_abs, tag = 'smem constant byte address 0x4 - core index']
  #allocation1 [shape = 'u32[72,128]{1,0:T(1,128)}', space=vmem, size = 0x9000, scoped, tag = 'internal scratch']
  %s0 = inlined_call_operand.vmem [shape: f32[4], index: 0, kind: input, shape index: {}]
  %s1 = inlined_call_operand.vmem [shape: f32[1,256], index: 1, kind: input, shape index: {}]
  %s2 = inlined_call_operand.vmem [shape: bf16[2,9,9,4], index: 2, kind: input, shape index: {}]
  %s3 = inlined_call_operand.vmem [shape: bf16[2,9,9,4], index: 3, kind: input, shape index: {}]
  %s4 = inlined_call_operand.vmem [shape: bf16[2,9,9,4], index: 4, kind: input, shape index: {}]
  %s5 = inlined_call_operand.vmem [shape: bf16[2,9,9,4], index: 5, kind: input, shape index: {}]
  %s6 = inlined_call_operand.vmem [shape: bf16[36,256], index: 6, kind: input, shape index: {}]
  %s7 = inlined_call_operand.vmem [shape: f32[128,4], index: 7, kind: output, shape index: {}]
  %s8 = sld [smem:[#allocation0]]
  $region42: #{mixed_op_pallas.1} parent=0
    _
  %s10 = ssub.s32 1, %s8
  %s11 = scalar_select 0, %s10, %s8
  $region1: #{mixed_op_pallas.1} parent=0
    #allocation2 [shape = 'u8[512]{0}', space=smem, size = 0x200, scoped, tag = 'input window, operand 0, single buffered']
    #allocation3 [shape = 's32[1]{0}', space=sflag, size = 0x4, scoped, tag = 'scoped memory for mixed_op_pallas.1']
    %12 = vsyncpa [#allocation3], 0
    // Predicated region
    $region2: #{mixed_op_pallas.1} parent=1 // pred_check
      _
    $region3: #{mixed_op_pallas.1} parent=1 // pred_check_branch
      %14 = sbr.rel (0) target = $region5
    $region4: #{mixed_op_pallas.1} parent=1 // pred_region
      %16 = vsyncadd [#allocation3], 0
      %s18 = sshll.u32 %s0, 4
      %s19 = int_to_ptr.vmem [resolvable:$true] %s18
      %21 = dma.vmem_to_smem %s19, 16, [#allocation2], [#allocation3]
    $region5: #{mixed_op_pallas.1} parent=1 // pred_fallthru
      _
    // Predicated region
    $region6: #{mixed_op_pallas.1} parent=1 // pred_check
      _
    $region7: #{mixed_op_pallas.1} parent=1 // pred_check_branch
      %23 = sbr.rel (0) target = $region9
    $region8: #{mixed_op_pallas.1} parent=1 // pred_region
      _
    $region9: #{mixed_op_pallas.1} parent=1 // pred_fallthru
      _
    // Predicated region
    $region10: #{mixed_op_pallas.1} parent=1 // pred_check
      _
    $region11: #{mixed_op_pallas.1} parent=1 // pred_check_branch
      %25 = sbr.rel (0) target = $region13
    $region12: #{mixed_op_pallas.1} parent=1 // pred_region
      _
    $region13: #{mixed_op_pallas.1} parent=1 // pred_fallthru
      _
    // Predicated region
    $region14: #{mixed_op_pallas.1} parent=1 // pred_check
      _
    $region15: #{mixed_op_pallas.1} parent=1 // pred_check_branch
      %27 = sbr.rel (0) target = $region17
    $region16: #{mixed_op_pallas.1} parent=1 // pred_region
      _
    $region17: #{mixed_op_pallas.1} parent=1 // pred_fallthru
      _
    // Predicated region
    $region18: #{mixed_op_pallas.1} parent=1 // pred_check
      _
    $region19: #{mixed_op_pallas.1} parent=1 // pred_check_branch
      %29 = sbr.rel (0) target = $region21
    $region20: #{mixed_op_pallas.1} parent=1 // pred_region
      _
    $region21: #{mixed_op_pallas.1} parent=1 // pred_fallthru
      _
    // Predicated region
    $region22: #{mixed_op_pallas.1} parent=1 // pred_check
      _
    $region23: #{mixed_op_pallas.1} parent=1 // pred_check_branch
      %31 = sbr.rel (0) target = $region25
    $region24: #{mixed_op_pallas.1} parent=1 // pred_region
      _
    $region25: #{mixed_op_pallas.1} parent=1 // pred_fallthru
      _
    // Predicated region
    $region26: #{mixed_op_pallas.1} parent=1 // pred_check
      _
    $region27: #{mixed_op_pallas.1} parent=1 // pred_check_branch
      %33 = sbr.rel (0) target = $region29
    $region28: #{mixed_op_pallas.1} parent=1 // pred_region
      _
    $region29: #{mixed_op_pallas.1} parent=1 // pred_fallthru
      _
    // Predicated region
    $region30: #{mixed_op_pallas.1} parent=1 // pred_check
      _
    $region31: #{mixed_op_pallas.1} parent=1 // pred_check_branch
      %35 = sbr.rel (0) target = $region33
    $region32: #{mixed_op_pallas.1} parent=1 // pred_region
      %37 = dma.done [#allocation3], 16
    $region33: #{mixed_op_pallas.1} parent=1 // pred_fallthru
      _
    %38 = sfence
    %v40 = vld [vmem:[%s2 + $0x8] sm:$0xf]
    %v41 = vld [vmem:[%s2 + $0xc] sm:$0x1]
    %v42 = vld [vmem:[%s2 + $0x10] sm:$0xf]
    %v43 = vld [vmem:[%s2 + $0x14] sm:$0x1]
    %v44 = vld [vmem:[%s2 + $0x18] sm:$0xf]
    %v45 = vld [vmem:[%s2 + $0x1c] sm:$0x1]
    %v46 = vld [vmem:[%s2 + $0x20] sm:$0xf]
    %v47 = vld [vmem:[%s2 + $0x24] sm:$0x1]
    %v48 = vld [vmem:[%s2 + $0x28] sm:$0xf]
    %v49 = vld [vmem:[%s2 + $0x2c] sm:$0x1]
    %v50 = vld [vmem:[%s2 + $0x30] sm:$0xf]
    %v51 = vld [vmem:[%s2 + $0x34] sm:$0x1]
    %v52 = vld [vmem:[%s2 + $0x38] sm:$0xf]
    %v53 = vld [vmem:[%s2 + $0x3c] sm:$0x1]
    %v54 = vld [vmem:[%s2 + $0x40] sm:$0xf]
    %v55 = vld [vmem:[%s2 + $0x44] sm:$0x1]
    %v56 = vld [vmem:[%s2 + $0x50] sm:$0xf]
    %v57 = vld [vmem:[%s2 + $0x54] sm:$0x1]
    %v58 = vld [vmem:[%s2 + $0x58] sm:$0xf]
    %v59 = vld [vmem:[%s2 + $0x5c] sm:$0x1]
    %v60 = vld [vmem:[%s2 + $0x60] sm:$0xf]
    %v61 = vld [vmem:[%s2 + $0x64] sm:$0x1]
    %v62 = vld [vmem:[%s2 + $0x68] sm:$0xf]
    %v63 = vld [vmem:[%s2 + $0x6c] sm:$0x1]
    %v64 = vld [vmem:[%s2 + $0x70] sm:$0xf]
    %v65 = vld [vmem:[%s2 + $0x74] sm:$0x1]
    %v66 = vld [vmem:[%s2 + $0x78] sm:$0xf]
    %v67 = vld [vmem:[%s2 + $0x7c] sm:$0x1]
    %v68 = vld [vmem:[%s2 + $0x80] sm:$0xf]
    %v69 = vld [vmem:[%s2 + $0x84] sm:$0x1]
    %v70 = vld [vmem:[%s2 + $0x88] sm:$0xf]
    %v71 = vld [vmem:[%s2 + $0x8c] sm:$0x1]
    %v72 = vld [vmem:[%s3 + $0x8] sm:$0xf]
    %v73 = vld [vmem:[%s3 + $0xc] sm:$0x1]
    %v74 = vld [vmem:[%s3 + $0x10] sm:$0xf]
    %v75 = vld [vmem:[%s3 + $0x14] sm:$0x1]
    %v76 = vld [vmem:[%s3 + $0x18] sm:$0xf]
    %v77 = vld [vmem:[%s3 + $0x1c] sm:$0x1]
    %v78 = vld [vmem:[%s3 + $0x20] sm:$0xf]
    %v79 = vld [vmem:[%s3 + $0x24] sm:$0x1]
    %v80 = vld [vmem:[%s3 + $0x28] sm:$0xf]
    %v81 = vld [vmem:[%s3 + $0x2c] sm:$0x1]
    %v82 = vld [vmem:[%s3 + $0x30] sm:$0xf]
    %v83 = vld [vmem:[%s3 + $0x34] sm:$0x1]
    %v84 = vld [vmem:[%s3 + $0x38] sm:$0xf]
    %v85 = vld [vmem:[%s3 + $0x3c] sm:$0x1]
    %v86 = vld [vmem:[%s3 + $0x40] sm:$0xf]
    %v87 = vld [vmem:[%s3 + $0x44] sm:$0x1]
    %v88 = vld [vmem:[%s3 + $0x50] sm:$0xf]
    %v89 = vld [vmem:[%s3 + $0x54] sm:$0x1]
    %v90 = vld [vmem:[%s3 + $0x58] sm:$0xf]
    %v91 = vld [vmem:[%s3 + $0x5c] sm:$0x1]
    %v92 = vld [vmem:[%s3 + $0x60] sm:$0xf]
    %v93 = vld [vmem:[%s3 + $0x64] sm:$0x1]
    %v94 = vld [vmem:[%s3 + $0x68] sm:$0xf]
    %v95 = vld [vmem:[%s3 + $0x6c] sm:$0x1]
    %v96 = vld [vmem:[%s3 + $0x70] sm:$0xf]
    %v97 = vld [vmem:[%s3 + $0x74] sm:$0x1]
    %v98 = vld [vmem:[%s3 + $0x78] sm:$0xf]
    %v99 = vld [vmem:[%s3 + $0x7c] sm:$0x1]
    %v100 = vld [vmem:[%s3 + $0x80] sm:$0xf]
    %v101 = vld [vmem:[%s3 + $0x84] sm:$0x1]
    %v102 = vld [vmem:[%s3 + $0x88] sm:$0xf]
    %v103 = vld [vmem:[%s3 + $0x8c] sm:$0x1]
    %v104 = vld [vmem:[%s4] sm:$0xf]
    %v105 = vld [vmem:[%s4 + $0x4] sm:$0x1]
    %v106 = vld [vmem:[%s4 + $0x8] sm:$0xf]
    %v107 = vld [vmem:[%s4 + $0xc] sm:$0x1]
    %v108 = vld [vmem:[%s4 + $0x10] sm:$0xf]
    %v109 = vld [vmem:[%s4 + $0x14] sm:$0x1]
    %v110 = vld [vmem:[%s4 + $0x18] sm:$0xf]
    %v111 = vld [vmem:[%s4 + $0x1c] sm:$0x1]
    %v112 = vld [vmem:[%s4 + $0x20] sm:$0xf]
    %v113 = vld [vmem:[%s4 + $0x24] sm:$0x1]
    %v114 = vld [vmem:[%s4 + $0x28] sm:$0xf]
    %v115 = vld [vmem:[%s4 + $0x2c] sm:$0x1]
    %v116 = vld [vmem:[%s4 + $0x30] sm:$0xf]
    %v117 = vld [vmem:[%s4 + $0x34] sm:$0x1]
    %v118 = vld [vmem:[%s4 + $0x38] sm:$0xf]
    %v119 = vld [vmem:[%s4 + $0x3c] sm:$0x1]
    %v120 = vld [vmem:[%s4 + $0x40] sm:$0xf]
    %v121 = vld [vmem:[%s4 + $0x44] sm:$0x1]
    %v122 = vld [vmem:[%s4 + $0x48] sm:$0xf]
    %v123 = vld [vmem:[%s4 + $0x4c] sm:$0x1]
    %v124 = vld [vmem:[%s4 + $0x50] sm:$0xf]
    %v125 = vld [vmem:[%s4 + $0x54] sm:$0x1]
    %v126 = vld [vmem:[%s4 + $0x58] sm:$0xf]
    %v127 = vld [vmem:[%s4 + $0x5c] sm:$0x1]
    %v128 = vld [vmem:[%s4 + $0x60] sm:$0xf]
    %v129 = vld [vmem:[%s4 + $0x64] sm:$0x1]
    %v130 = vld [vmem:[%s4 + $0x68] sm:$0xf]
    %v131 = vld [vmem:[%s4 + $0x6c] sm:$0x1]
    %v132 = vld [vmem:[%s4 + $0x70] sm:$0xf]
    %v133 = vld [vmem:[%s4 + $0x74] sm:$0x1]
    %v134 = vld [vmem:[%s4 + $0x78] sm:$0xf]
    %v135 = vld [vmem:[%s4 + $0x7c] sm:$0x1]
    %v136 = vld [vmem:[%s4 + $0x80] sm:$0xf]
    %v137 = vld [vmem:[%s4 + $0x84] sm:$0x1]
    %v138 = vld [vmem:[%s4 + $0x88] sm:$0xf]
    %v139 = vld [vmem:[%s4 + $0x8c] sm:$0x1]
    %v140 = vld [vmem:[%s5] sm:$0xf]
    %v141 = vld [vmem:[%s5 + $0x4] sm:$0x1]
    %v142 = vld [vmem:[%s5 + $0x8] sm:$0xf]
    %v143 = vld [vmem:[%s5 + $0xc] sm:$0x1]
    %v144 = vld [vmem:[%s5 + $0x10] sm:$0xf]
    %v145 = vld [vmem:[%s5 + $0x14] sm:$0x1]
    %v146 = vld [vmem:[%s5 + $0x18] sm:$0xf]
    %v147 = vld [vmem:[%s5 + $0x1c] sm:$0x1]
    %v148 = vld [vmem:[%s5 + $0x20] sm:$0xf]
    %v149 = vld [vmem:[%s5 + $0x24] sm:$0x1]
    %v150 = vld [vmem:[%s5 + $0x28] sm:$0xf]
    %v151 = vld [vmem:[%s5 + $0x2c] sm:$0x1]
    %v152 = vld [vmem:[%s5 + $0x30] sm:$0xf]
    %v153 = vld [vmem:[%s5 + $0x34] sm:$0x1]
    %v154 = vld [vmem:[%s5 + $0x38] sm:$0xf]
    %v155 = vld [vmem:[%s5 + $0x3c] sm:$0x1]
    %v156 = vld [vmem:[%s5 + $0x40] sm:$0xf]
    %v157 = vld [vmem:[%s5 + $0x44] sm:$0x1]
    %v158 = vld [vmem:[%s5 + $0x48] sm:$0xf]
    %v159 = vld [vmem:[%s5 + $0x4c] sm:$0x1]
    %v160 = vld [vmem:[%s5 + $0x50] sm:$0xf]
    %v161 = vld [vmem:[%s5 + $0x54] sm:$0x1]
    %v162 = vld [vmem:[%s5 + $0x58] sm:$0xf]
    %v163 = vld [vmem:[%s5 + $0x5c] sm:$0x1]
    %v164 = vld [vmem:[%s5 + $0x60] sm:$0xf]
    %v165 = vld [vmem:[%s5 + $0x64] sm:$0x1]
    %v166 = vld [vmem:[%s5 + $0x68] sm:$0xf]
    %v167 = vld [vmem:[%s5 + $0x6c] sm:$0x1]
    %v168 = vld [vmem:[%s5 + $0x70] sm:$0xf]
    %v169 = vld [vmem:[%s5 + $0x74] sm:$0x1]
    %v170 = vld [vmem:[%s5 + $0x78] sm:$0xf]
    %v171 = vld [vmem:[%s5 + $0x7c] sm:$0x1]
    %v172 = vld [vmem:[%s5 + $0x80] sm:$0xf]
    %v173 = vld [vmem:[%s5 + $0x84] sm:$0x1]
    %v174 = vld [vmem:[%s5 + $0x88] sm:$0xf]
    %v175 = vld [vmem:[%s5 + $0x8c] sm:$0x1]
    %vm176 = vsmask.f32 3328
    %vm177 = vsmask.f32 7440
    %vm178 = vmor %vm176, %vm177
    %v180 = vshrl.u32 %v104, 16
    %v182 = vrot.slane %v180, 4
    %v183 = vshll.u32 %v104, 16
    %v185 = vrot.slane %v183, 5
    %v186 = vor.u32 %v182, %v185
    %v187 = vrot.slane %v186, 4
    %v189 = vshll.u32 %v105, 16
    %v191 = vrot.slane %v189, 5
    %v192 = vsel %vm178, %v187, %v191
    %v194 = vshrl.u32 %v106, 16
    %v196 = vrot.slane %v194, 4
    %v197 = vshll.u32 %v106, 16
    %v199 = vrot.slane %v197, 5
    %v200 = vor.u32 %v196, %v199
    %v201 = vrot.slane %v200, 4
    %v203 = vshll.u32 %v107, 16
    %v205 = vrot.slane %v203, 5
    %v206 = vsel %vm178, %v201, %v205
    %v208 = vshrl.u32 %v108, 16
    %v210 = vrot.slane %v208, 4
    %v211 = vshll.u32 %v108, 16
    %v213 = vrot.slane %v211, 5
    %v214 = vor.u32 %v210, %v213
    %v215 = vrot.slane %v214, 4
    %v217 = vshll.u32 %v109, 16
    %v219 = vrot.slane %v217, 5
    %v220 = vsel %vm178, %v215, %v219
    %v222 = vshrl.u32 %v110, 16
    %v224 = vrot.slane %v222, 4
    %v225 = vshll.u32 %v110, 16
    %v227 = vrot.slane %v225, 5
    %v228 = vor.u32 %v224, %v227
    %v229 = vrot.slane %v228, 4
    %v231 = vshll.u32 %v111, 16
    %v233 = vrot.slane %v231, 5
    %v234 = vsel %vm178, %v229, %v233
    %v236 = vshrl.u32 %v112, 16
    %v238 = vrot.slane %v236, 4
    %v239 = vshll.u32 %v112, 16
    %v241 = vrot.slane %v239, 5
    %v242 = vor.u32 %v238, %v241
    %v243 = vrot.slane %v242, 4
    %v245 = vshll.u32 %v113, 16
    %v247 = vrot.slane %v245, 5
    %v248 = vsel %vm178, %v243, %v247
    %v250 = vshrl.u32 %v114, 16
    %v252 = vrot.slane %v250, 4
    %v253 = vshll.u32 %v114, 16
    %v255 = vrot.slane %v253, 5
    %v256 = vor.u32 %v252, %v255
    %v257 = vrot.slane %v256, 4
    %v259 = vshll.u32 %v115, 16
    %v261 = vrot.slane %v259, 5
    %v262 = vsel %vm178, %v257, %v261
    %v264 = vshrl.u32 %v116, 16
    %v266 = vrot.slane %v264, 4
    %v267 = vshll.u32 %v116, 16
    %v269 = vrot.slane %v267, 5
    %v270 = vor.u32 %v266, %v269
    %v271 = vrot.slane %v270, 4
    %v273 = vshll.u32 %v117, 16
    %v275 = vrot.slane %v273, 5
    %v276 = vsel %vm178, %v271, %v275
    %v278 = vshrl.u32 %v118, 16
    %v280 = vrot.slane %v278, 4
    %v281 = vshll.u32 %v118, 16
    %v283 = vrot.slane %v281, 5
    %v284 = vor.u32 %v280, %v283
    %v285 = vrot.slane %v284, 4
    %v287 = vshll.u32 %v119, 16
    %v289 = vrot.slane %v287, 5
    %v290 = vsel %vm178, %v285, %v289
    %v292 = vshrl.u32 %v122, 16
    %v294 = vrot.slane %v292, 4
    %v295 = vshll.u32 %v122, 16
    %v297 = vrot.slane %v295, 5
    %v298 = vor.u32 %v294, %v297
    %v299 = vrot.slane %v298, 4
    %v301 = vshll.u32 %v123, 16
    %v303 = vrot.slane %v301, 5
    %v304 = vsel %vm178, %v299, %v303
    %v306 = vshrl.u32 %v124, 16
    %v308 = vrot.slane %v306, 4
    %v309 = vshll.u32 %v124, 16
    %v311 = vrot.slane %v309, 5
    %v312 = vor.u32 %v308, %v311
    %v313 = vrot.slane %v312, 4
    %v315 = vshll.u32 %v125, 16
    %v317 = vrot.slane %v315, 5
    %v318 = vsel %vm178, %v313, %v317
    %v320 = vshrl.u32 %v126, 16
    %v322 = vrot.slane %v320, 4
    %v323 = vshll.u32 %v126, 16
    %v325 = vrot.slane %v323, 5
    %v326 = vor.u32 %v322, %v325
    %v327 = vrot.slane %v326, 4
    %v329 = vshll.u32 %v127, 16
    %v331 = vrot.slane %v329, 5
    %v332 = vsel %vm178, %v327, %v331
    %v334 = vshrl.u32 %v128, 16
    %v336 = vrot.slane %v334, 4
    %v337 = vshll.u32 %v128, 16
    %v339 = vrot.slane %v337, 5
    %v340 = vor.u32 %v336, %v339
    %v341 = vrot.slane %v340, 4
    %v343 = vshll.u32 %v129, 16
    %v345 = vrot.slane %v343, 5
    %v346 = vsel %vm178, %v341, %v345
    %v348 = vshrl.u32 %v130, 16
    %v350 = vrot.slane %v348, 4
    %v351 = vshll.u32 %v130, 16
    %v353 = vrot.slane %v351, 5
    %v354 = vor.u32 %v350, %v353
    %v355 = vrot.slane %v354, 4
    %v357 = vshll.u32 %v131, 16
    %v359 = vrot.slane %v357, 5
    %v360 = vsel %vm178, %v355, %v359
    %v362 = vshrl.u32 %v132, 16
    %v364 = vrot.slane %v362, 4
    %v365 = vshll.u32 %v132, 16
    %v367 = vrot.slane %v365, 5
    %v368 = vor.u32 %v364, %v367
    %v369 = vrot.slane %v368, 4
    %v371 = vshll.u32 %v133, 16
    %v373 = vrot.slane %v371, 5
    %v374 = vsel %vm178, %v369, %v373
    %v376 = vshrl.u32 %v134, 16
    %v378 = vrot.slane %v376, 4
    %v379 = vshll.u32 %v134, 16
    %v381 = vrot.slane %v379, 5
    %v382 = vor.u32 %v378, %v381
    %v383 = vrot.slane %v382, 4
    %v385 = vshll.u32 %v135, 16
    %v387 = vrot.slane %v385, 5
    %v388 = vsel %vm178, %v383, %v387
    %v390 = vshrl.u32 %v136, 16
    %v392 = vrot.slane %v390, 4
    %v393 = vshll.u32 %v136, 16
    %v395 = vrot.slane %v393, 5
    %v396 = vor.u32 %v392, %v395
    %v397 = vrot.slane %v396, 4
    %v399 = vshll.u32 %v137, 16
    %v401 = vrot.slane %v399, 5
    %v402 = vsel %vm178, %v397, %v401
    %v420 = vshrl.u32 %v140, 16
    %v422 = vrot.slane %v420, 4
    %v423 = vshll.u32 %v140, 16
    %v425 = vrot.slane %v423, 5
    %v426 = vor.u32 %v422, %v425
    %v427 = vrot.slane %v426, 4
    %v429 = vshll.u32 %v141, 16
    %v431 = vrot.slane %v429, 5
    %v432 = vsel %vm178, %v427, %v431
    %v434 = vshrl.u32 %v142, 16
    %v436 = vrot.slane %v434, 4
    %v437 = vshll.u32 %v142, 16
    %v439 = vrot.slane %v437, 5
    %v440 = vor.u32 %v436, %v439
    %v441 = vrot.slane %v440, 4
    %v443 = vshll.u32 %v143, 16
    %v445 = vrot.slane %v443, 5
    %v446 = vsel %vm178, %v441, %v445
    %v448 = vshrl.u32 %v144, 16
    %v450 = vrot.slane %v448, 4
    %v451 = vshll.u32 %v144, 16
    %v453 = vrot.slane %v451, 5
    %v454 = vor.u32 %v450, %v453
    %v455 = vrot.slane %v454, 4
    %v457 = vshll.u32 %v145, 16
    %v459 = vrot.slane %v457, 5
    %v460 = vsel %vm178, %v455, %v459
    %v462 = vshrl.u32 %v146, 16
    %v464 = vrot.slane %v462, 4
    %v465 = vshll.u32 %v146, 16
    %v467 = vrot.slane %v465, 5
    %v468 = vor.u32 %v464, %v467
    %v469 = vrot.slane %v468, 4
    %v471 = vshll.u32 %v147, 16
    %v473 = vrot.slane %v471, 5
    %v474 = vsel %vm178, %v469, %v473
    %v476 = vshrl.u32 %v148, 16
    %v478 = vrot.slane %v476, 4
    %v479 = vshll.u32 %v148, 16
    %v481 = vrot.slane %v479, 5
    %v482 = vor.u32 %v478, %v481
    %v483 = vrot.slane %v482, 4
    %v485 = vshll.u32 %v149, 16
    %v487 = vrot.slane %v485, 5
    %v488 = vsel %vm178, %v483, %v487
    %v490 = vshrl.u32 %v150, 16
    %v492 = vrot.slane %v490, 4
    %v493 = vshll.u32 %v150, 16
    %v495 = vrot.slane %v493, 5
    %v496 = vor.u32 %v492, %v495
    %v497 = vrot.slane %v496, 4
    %v499 = vshll.u32 %v151, 16
    %v501 = vrot.slane %v499, 5
    %v502 = vsel %vm178, %v497, %v501
    %v504 = vshrl.u32 %v152, 16
    %v506 = vrot.slane %v504, 4
    %v507 = vshll.u32 %v152, 16
    %v509 = vrot.slane %v507, 5
    %v510 = vor.u32 %v506, %v509
    %v511 = vrot.slane %v510, 4
    %v513 = vshll.u32 %v153, 16
    %v515 = vrot.slane %v513, 5
    %v516 = vsel %vm178, %v511, %v515
    %v518 = vshrl.u32 %v154, 16
    %v520 = vrot.slane %v518, 4
    %v521 = vshll.u32 %v154, 16
    %v523 = vrot.slane %v521, 5
    %v524 = vor.u32 %v520, %v523
    %v525 = vrot.slane %v524, 4
    %v527 = vshll.u32 %v155, 16
    %v529 = vrot.slane %v527, 5
    %v530 = vsel %vm178, %v525, %v529
    %v532 = vshrl.u32 %v158, 16
    %v534 = vrot.slane %v532, 4
    %v535 = vshll.u32 %v158, 16
    %v537 = vrot.slane %v535, 5
    %v538 = vor.u32 %v534, %v537
    %v539 = vrot.slane %v538, 4
    %v541 = vshll.u32 %v159, 16
    %v543 = vrot.slane %v541, 5
    %v544 = vsel %vm178, %v539, %v543
    %v546 = vshrl.u32 %v160, 16
    %v548 = vrot.slane %v546, 4
    %v549 = vshll.u32 %v160, 16
    %v551 = vrot.slane %v549, 5
    %v552 = vor.u32 %v548, %v551
    %v553 = vrot.slane %v552, 4
    %v555 = vshll.u32 %v161, 16
    %v557 = vrot.slane %v555, 5
    %v558 = vsel %vm178, %v553, %v557
    %v560 = vshrl.u32 %v162, 16
    %v562 = vrot.slane %v560, 4
    %v563 = vshll.u32 %v162, 16
    %v565 = vrot.slane %v563, 5
    %v566 = vor.u32 %v562, %v565
    %v567 = vrot.slane %v566, 4
    %v569 = vshll.u32 %v163, 16
    %v571 = vrot.slane %v569, 5
    %v572 = vsel %vm178, %v567, %v571
    %v574 = vshrl.u32 %v164, 16
    %v576 = vrot.slane %v574, 4
    %v577 = vshll.u32 %v164, 16
    %v579 = vrot.slane %v577, 5
    %v580 = vor.u32 %v576, %v579
    %v581 = vrot.slane %v580, 4
    %v583 = vshll.u32 %v165, 16
    %v585 = vrot.slane %v583, 5
    %v586 = vsel %vm178, %v581, %v585
    %v588 = vshrl.u32 %v166, 16
    %v590 = vrot.slane %v588, 4
    %v591 = vshll.u32 %v166, 16
    %v593 = vrot.slane %v591, 5
    %v594 = vor.u32 %v590, %v593
    %v595 = vrot.slane %v594, 4
    %v597 = vshll.u32 %v167, 16
    %v599 = vrot.slane %v597, 5
    %v600 = vsel %vm178, %v595, %v599
    %v602 = vshrl.u32 %v168, 16
    %v604 = vrot.slane %v602, 4
    %v605 = vshll.u32 %v168, 16
    %v607 = vrot.slane %v605, 5
    %v608 = vor.u32 %v604, %v607
    %v609 = vrot.slane %v608, 4
    %v611 = vshll.u32 %v169, 16
    %v613 = vrot.slane %v611, 5
    %v614 = vsel %vm178, %v609, %v613
    %v616 = vshrl.u32 %v170, 16
    %v618 = vrot.slane %v616, 4
    %v619 = vshll.u32 %v170, 16
    %v621 = vrot.slane %v619, 5
    %v622 = vor.u32 %v618, %v621
    %v623 = vrot.slane %v622, 4
    %v625 = vshll.u32 %v171, 16
    %v627 = vrot.slane %v625, 5
    %v628 = vsel %vm178, %v623, %v627
    %v630 = vshrl.u32 %v172, 16
    %v632 = vrot.slane %v630, 4
    %v633 = vshll.u32 %v172, 16
    %v635 = vrot.slane %v633, 5
    %v636 = vor.u32 %v632, %v635
    %v637 = vrot.slane %v636, 4
    %v639 = vshll.u32 %v173, 16
    %v641 = vrot.slane %v639, 5
    %v642 = vsel %vm178, %v637, %v641
    %v660 = vshrl.u32 %v40, 16
    %v662 = vrot.slane %v660, 4
    %v663 = vshll.u32 %v40, 16
    %v665 = vrot.slane %v663, 5
    %v666 = vor.u32 %v662, %v665
    %v667 = vrot.slane %v666, 4
    %v669 = vshll.u32 %v41, 16
    %v671 = vrot.slane %v669, 5
    %v672 = vsel %vm178, %v667, %v671
    %v674 = vshrl.u32 %v42, 16
    %v676 = vrot.slane %v674, 4
    %v677 = vshll.u32 %v42, 16
    %v679 = vrot.slane %v677, 5
    %v680 = vor.u32 %v676, %v679
    %v681 = vrot.slane %v680, 4
    %v683 = vshll.u32 %v43, 16
    %v685 = vrot.slane %v683, 5
    %v686 = vsel %vm178, %v681, %v685
    %v688 = vshrl.u32 %v44, 16
    %v690 = vrot.slane %v688, 4
    %v691 = vshll.u32 %v44, 16
    %v693 = vrot.slane %v691, 5
    %v694 = vor.u32 %v690, %v693
    %v695 = vrot.slane %v694, 4
    %v697 = vshll.u32 %v45, 16
    %v699 = vrot.slane %v697, 5
    %v700 = vsel %vm178, %v695, %v699
    %v702 = vshrl.u32 %v46, 16
    %v704 = vrot.slane %v702, 4
    %v705 = vshll.u32 %v46, 16
    %v707 = vrot.slane %v705, 5
    %v708 = vor.u32 %v704, %v707
    %v709 = vrot.slane %v708, 4
    %v711 = vshll.u32 %v47, 16
    %v713 = vrot.slane %v711, 5
    %v714 = vsel %vm178, %v709, %v713
    %v716 = vshrl.u32 %v48, 16
    %v718 = vrot.slane %v716, 4
    %v719 = vshll.u32 %v48, 16
    %v721 = vrot.slane %v719, 5
    %v722 = vor.u32 %v718, %v721
    %v723 = vrot.slane %v722, 4
    %v725 = vshll.u32 %v49, 16
    %v727 = vrot.slane %v725, 5
    %v728 = vsel %vm178, %v723, %v727
    %v730 = vshrl.u32 %v50, 16
    %v732 = vrot.slane %v730, 4
    %v733 = vshll.u32 %v50, 16
    %v735 = vrot.slane %v733, 5
    %v736 = vor.u32 %v732, %v735
    %v737 = vrot.slane %v736, 4
    %v739 = vshll.u32 %v51, 16
    %v741 = vrot.slane %v739, 5
    %v742 = vsel %vm178, %v737, %v741
    %v744 = vshrl.u32 %v52, 16
    %v746 = vrot.slane %v744, 4
    %v747 = vshll.u32 %v52, 16
    %v749 = vrot.slane %v747, 5
    %v750 = vor.u32 %v746, %v749
    %v751 = vrot.slane %v750, 4
    %v753 = vshll.u32 %v53, 16
    %v755 = vrot.slane %v753, 5
    %v756 = vsel %vm178, %v751, %v755
    %v758 = vshrl.u32 %v54, 16
    %v760 = vrot.slane %v758, 4
    %v761 = vshll.u32 %v54, 16
    %v763 = vrot.slane %v761, 5
    %v764 = vor.u32 %v760, %v763
    %v765 = vrot.slane %v764, 4
    %v767 = vshll.u32 %v55, 16
    %v769 = vrot.slane %v767, 5
    %v770 = vsel %vm178, %v765, %v769
    %v772 = vshrl.u32 %v56, 16
    %v774 = vrot.slane %v772, 4
    %v775 = vshll.u32 %v56, 16
    %v777 = vrot.slane %v775, 5
    %v778 = vor.u32 %v774, %v777
    %v779 = vrot.slane %v778, 4
    %v781 = vshll.u32 %v57, 16
    %v783 = vrot.slane %v781, 5
    %v784 = vsel %vm178, %v779, %v783
    %v786 = vshrl.u32 %v58, 16
    %v788 = vrot.slane %v786, 4
    %v789 = vshll.u32 %v58, 16
    %v791 = vrot.slane %v789, 5
    %v792 = vor.u32 %v788, %v791
    %v793 = vrot.slane %v792, 4
    %v795 = vshll.u32 %v59, 16
    %v797 = vrot.slane %v795, 5
    %v798 = vsel %vm178, %v793, %v797
    %v800 = vshrl.u32 %v60, 16
    %v802 = vrot.slane %v800, 4
    %v803 = vshll.u32 %v60, 16
    %v805 = vrot.slane %v803, 5
    %v806 = vor.u32 %v802, %v805
    %v807 = vrot.slane %v806, 4
    %v809 = vshll.u32 %v61, 16
    %v811 = vrot.slane %v809, 5
    %v812 = vsel %vm178, %v807, %v811
    %v814 = vshrl.u32 %v62, 16
    %v816 = vrot.slane %v814, 4
    %v817 = vshll.u32 %v62, 16
    %v819 = vrot.slane %v817, 5
    %v820 = vor.u32 %v816, %v819
    %v821 = vrot.slane %v820, 4
    %v823 = vshll.u32 %v63, 16
    %v825 = vrot.slane %v823, 5
    %v826 = vsel %vm178, %v821, %v825
    %v828 = vshrl.u32 %v64, 16
    %v830 = vrot.slane %v828, 4
    %v831 = vshll.u32 %v64, 16
    %v833 = vrot.slane %v831, 5
    %v834 = vor.u32 %v830, %v833
    %v835 = vrot.slane %v834, 4
    %v837 = vshll.u32 %v65, 16
    %v839 = vrot.slane %v837, 5
    %v840 = vsel %vm178, %v835, %v839
    %v842 = vshrl.u32 %v66, 16
    %v844 = vrot.slane %v842, 4
    %v845 = vshll.u32 %v66, 16
    %v847 = vrot.slane %v845, 5
    %v848 = vor.u32 %v844, %v847
    %v849 = vrot.slane %v848, 4
    %v851 = vshll.u32 %v67, 16
    %v853 = vrot.slane %v851, 5
    %v854 = vsel %vm178, %v849, %v853
    %v856 = vshrl.u32 %v68, 16
    %v858 = vrot.slane %v856, 4
    %v859 = vshll.u32 %v68, 16
    %v861 = vrot.slane %v859, 5
    %v862 = vor.u32 %v858, %v861
    %v863 = vrot.slane %v862, 4
    %v865 = vshll.u32 %v69, 16
    %v867 = vrot.slane %v865, 5
    %v868 = vsel %vm178, %v863, %v867
    %v870 = vshrl.u32 %v70, 16
    %v872 = vrot.slane %v870, 4
    %v873 = vshll.u32 %v70, 16
    %v875 = vrot.slane %v873, 5
    %v876 = vor.u32 %v872, %v875
    %v877 = vrot.slane %v876, 4
    %v879 = vshll.u32 %v71, 16
    %v881 = vrot.slane %v879, 5
    %v882 = vsel %vm178, %v877, %v881
    %v900 = vshrl.u32 %v72, 16
    %v902 = vrot.slane %v900, 4
    %v903 = vshll.u32 %v72, 16
    %v905 = vrot.slane %v903, 5
    %v906 = vor.u32 %v902, %v905
    %v907 = vrot.slane %v906, 4
    %v909 = vshll.u32 %v73, 16
    %v911 = vrot.slane %v909, 5
    %v912 = vsel %vm178, %v907, %v911
    %v914 = vshrl.u32 %v74, 16
    %v916 = vrot.slane %v914, 4
    %v917 = vshll.u32 %v74, 16
    %v919 = vrot.slane %v917, 5
    %v920 = vor.u32 %v916, %v919
    %v921 = vrot.slane %v920, 4
    %v923 = vshll.u32 %v75, 16
    %v925 = vrot.slane %v923, 5
    %v926 = vsel %vm178, %v921, %v925
    %v928 = vshrl.u32 %v76, 16
    %v930 = vrot.slane %v928, 4
    %v931 = vshll.u32 %v76, 16
    %v933 = vrot.slane %v931, 5
    %v934 = vor.u32 %v930, %v933
    %v935 = vrot.slane %v934, 4
    %v937 = vshll.u32 %v77, 16
    %v939 = vrot.slane %v937, 5
    %v940 = vsel %vm178, %v935, %v939
    %v942 = vshrl.u32 %v78, 16
    %v944 = vrot.slane %v942, 4
    %v945 = vshll.u32 %v78, 16
    %v947 = vrot.slane %v945, 5
    %v948 = vor.u32 %v944, %v947
    %v949 = vrot.slane %v948, 4
    %v951 = vshll.u32 %v79, 16
    %v953 = vrot.slane %v951, 5
    %v954 = vsel %vm178, %v949, %v953
    %v956 = vshrl.u32 %v80, 16
    %v958 = vrot.slane %v956, 4
    %v959 = vshll.u32 %v80, 16
    %v961 = vrot.slane %v959, 5
    %v962 = vor.u32 %v958, %v961
    %v963 = vrot.slane %v962, 4
    %v965 = vshll.u32 %v81, 16
    %v967 = vrot.slane %v965, 5
    %v968 = vsel %vm178, %v963, %v967
    %v970 = vshrl.u32 %v82, 16
    %v972 = vrot.slane %v970, 4
    %v973 = vshll.u32 %v82, 16
    %v975 = vrot.slane %v973, 5
    %v976 = vor.u32 %v972, %v975
    %v977 = vrot.slane %v976, 4
    %v979 = vshll.u32 %v83, 16
    %v981 = vrot.slane %v979, 5
    %v982 = vsel %vm178, %v977, %v981
    %v984 = vshrl.u32 %v84, 16
    %v986 = vrot.slane %v984, 4
    %v987 = vshll.u32 %v84, 16
    %v989 = vrot.slane %v987, 5
    %v990 = vor.u32 %v986, %v989
    %v991 = vrot.slane %v990, 4
    %v993 = vshll.u32 %v85, 16
    %v995 = vrot.slane %v993, 5
    %v996 = vsel %vm178, %v991, %v995
    %v998 = vshrl.u32 %v86, 16
    %v1000 = vrot.slane %v998, 4
    %v1001 = vshll.u32 %v86, 16
    %v1003 = vrot.slane %v1001, 5
    %v1004 = vor.u32 %v1000, %v1003
    %v1005 = vrot.slane %v1004, 4
    %v1007 = vshll.u32 %v87, 16
    %v1009 = vrot.slane %v1007, 5
    %v1010 = vsel %vm178, %v1005, %v1009
    %v1012 = vshrl.u32 %v88, 16
    %v1014 = vrot.slane %v1012, 4
    %v1015 = vshll.u32 %v88, 16
    %v1017 = vrot.slane %v1015, 5
    %v1018 = vor.u32 %v1014, %v1017
    %v1019 = vrot.slane %v1018, 4
    %v1021 = vshll.u32 %v89, 16
    %v1023 = vrot.slane %v1021, 5
    %v1024 = vsel %vm178, %v1019, %v1023
    %v1026 = vshrl.u32 %v90, 16
    %v1028 = vrot.slane %v1026, 4
    %v1029 = vshll.u32 %v90, 16
    %v1031 = vrot.slane %v1029, 5
    %v1032 = vor.u32 %v1028, %v1031
    %v1033 = vrot.slane %v1032, 4
    %v1035 = vshll.u32 %v91, 16
    %v1037 = vrot.slane %v1035, 5
    %v1038 = vsel %vm178, %v1033, %v1037
    %v1040 = vshrl.u32 %v92, 16
    %v1042 = vrot.slane %v1040, 4
    %v1043 = vshll.u32 %v92, 16
    %v1045 = vrot.slane %v1043, 5
    %v1046 = vor.u32 %v1042, %v1045
    %v1047 = vrot.slane %v1046, 4
    %v1049 = vshll.u32 %v93, 16
    %v1051 = vrot.slane %v1049, 5
    %v1052 = vsel %vm178, %v1047, %v1051
    %v1054 = vshrl.u32 %v94, 16
    %v1056 = vrot.slane %v1054, 4
    %v1057 = vshll.u32 %v94, 16
    %v1059 = vrot.slane %v1057, 5
    %v1060 = vor.u32 %v1056, %v1059
    %v1061 = vrot.slane %v1060, 4
    %v1063 = vshll.u32 %v95, 16
    %v1065 = vrot.slane %v1063, 5
    %v1066 = vsel %vm178, %v1061, %v1065
    %v1068 = vshrl.u32 %v96, 16
    %v1070 = vrot.slane %v1068, 4
    %v1071 = vshll.u32 %v96, 16
    %v1073 = vrot.slane %v1071, 5
    %v1074 = vor.u32 %v1070, %v1073
    %v1075 = vrot.slane %v1074, 4
    %v1077 = vshll.u32 %v97, 16
    %v1079 = vrot.slane %v1077, 5
    %v1080 = vsel %vm178, %v1075, %v1079
    %v1082 = vshrl.u32 %v98, 16
    %v1084 = vrot.slane %v1082, 4
    %v1085 = vshll.u32 %v98, 16
    %v1087 = vrot.slane %v1085, 5
    %v1088 = vor.u32 %v1084, %v1087
    %v1089 = vrot.slane %v1088, 4
    %v1091 = vshll.u32 %v99, 16
    %v1093 = vrot.slane %v1091, 5
    %v1094 = vsel %vm178, %v1089, %v1093
    %v1096 = vshrl.u32 %v100, 16
    %v1098 = vrot.slane %v1096, 4
    %v1099 = vshll.u32 %v100, 16
    %v1101 = vrot.slane %v1099, 5
    %v1102 = vor.u32 %v1098, %v1101
    %v1103 = vrot.slane %v1102, 4
    %v1105 = vshll.u32 %v101, 16
    %v1107 = vrot.slane %v1105, 5
    %v1108 = vsel %vm178, %v1103, %v1107
    %v1110 = vshrl.u32 %v102, 16
    %v1112 = vrot.slane %v1110, 4
    %v1113 = vshll.u32 %v102, 16
    %v1115 = vrot.slane %v1113, 5
    %v1116 = vor.u32 %v1112, %v1115
    %v1117 = vrot.slane %v1116, 4
    %v1119 = vshll.u32 %v103, 16
    %v1121 = vrot.slane %v1119, 5
    %v1122 = vsel %vm178, %v1117, %v1121
    %v1140 = vshrl.u32 %v120, 16
    %v1142 = vrot.slane %v1140, 4
    %v1143 = vshll.u32 %v120, 16
    %v1145 = vrot.slane %v1143, 5
    %v1146 = vor.u32 %v1142, %v1145
    %v1147 = vrot.slane %v1146, 4
    %v1149 = vshll.u32 %v121, 16
    %v1151 = vrot.slane %v1149, 5
    %v1152 = vsel %vm178, %v1147, %v1151
    %v1154 = vshrl.u32 %v138, 16
    %v1156 = vrot.slane %v1154, 4
    %v1157 = vshll.u32 %v138, 16
    %v1159 = vrot.slane %v1157, 5
    %v1160 = vor.u32 %v1156, %v1159
    %v1161 = vrot.slane %v1160, 4
    %v1163 = vshll.u32 %v139, 16
    %v1165 = vrot.slane %v1163, 5
    %v1166 = vsel %vm178, %v1161, %v1165
    %v1170 = vshrl.u32 %v156, 16
    %v1172 = vrot.slane %v1170, 4
    %v1173 = vshll.u32 %v156, 16
    %v1175 = vrot.slane %v1173, 5
    %v1176 = vor.u32 %v1172, %v1175
    %v1177 = vrot.slane %v1176, 4
    %v1179 = vshll.u32 %v157, 16
    %v1181 = vrot.slane %v1179, 5
    %v1182 = vsel %vm178, %v1177, %v1181
    %v1184 = vshrl.u32 %v174, 16
    %v1186 = vrot.slane %v1184, 4
    %v1187 = vshll.u32 %v174, 16
    %v1189 = vrot.slane %v1187, 5
    %v1190 = vor.u32 %v1186, %v1189
    %v1191 = vrot.slane %v1190, 4
    %v1193 = vshll.u32 %v175, 16
    %v1195 = vrot.slane %v1193, 5
    %v1196 = vsel %vm178, %v1191, %v1195
    %v1199 = vunpack.c.l.bf16 %v140
    %v1200 = vunpack.c.l.bf16 %v142
    %v1201 = vunpack.c.l.bf16 %v144
    %v1202 = vunpack.c.l.bf16 %v146
    %v1203 = vunpack.c.l.bf16 %v148
    %v1204 = vunpack.c.l.bf16 %v150
    %v1205 = vunpack.c.l.bf16 %v152
    %v1206 = vunpack.c.l.bf16 %v154
    %v1207 = vunpack.c.l.bf16 %v158
    %v1208 = vunpack.c.l.bf16 %v160
    %v1209 = vunpack.c.l.bf16 %v162
    %v1210 = vunpack.c.l.bf16 %v164
    %v1211 = vunpack.c.l.bf16 %v166
    %v1212 = vunpack.c.l.bf16 %v168
    %v1213 = vunpack.c.l.bf16 %v170
    %v1214 = vunpack.c.l.bf16 %v172
    %v1215 = vmax.f32 %v1199, 0.0
    %v1216 = vmax.f32 %v1200, 0.0
    %v1217 = vmax.f32 %v1201, 0.0
    %v1218 = vmax.f32 %v1202, 0.0
    %v1219 = vmax.f32 %v1203, 0.0
    %v1220 = vmax.f32 %v1204, 0.0
    %v1221 = vmax.f32 %v1205, 0.0
    %v1222 = vmax.f32 %v1206, 0.0
    %v1223 = vmax.f32 %v1207, 0.0
    %v1224 = vmax.f32 %v1208, 0.0
    %v1225 = vmax.f32 %v1209, 0.0
    %v1226 = vmax.f32 %v1210, 0.0
    %v1227 = vmax.f32 %v1211, 0.0
    %v1228 = vmax.f32 %v1212, 0.0
    %v1229 = vmax.f32 %v1213, 0.0
    %v1230 = vmax.f32 %v1214, 0.0
    %v1231 = vpack.c.bf16 %v1215, %v1215
    %v1232 = vpack.c.bf16 %v1216, %v1216
    %v1233 = vpack.c.bf16 %v1217, %v1217
    %v1234 = vpack.c.bf16 %v1218, %v1218
    %v1235 = vpack.c.bf16 %v1219, %v1219
    %v1236 = vpack.c.bf16 %v1220, %v1220
    %v1237 = vpack.c.bf16 %v1221, %v1221
    %v1238 = vpack.c.bf16 %v1222, %v1222
    %v1239 = vpack.c.bf16 %v1223, %v1223
    %v1240 = vpack.c.bf16 %v1224, %v1224
    %v1241 = vpack.c.bf16 %v1225, %v1225
    %v1242 = vpack.c.bf16 %v1226, %v1226
    %v1243 = vpack.c.bf16 %v1227, %v1227
    %v1244 = vpack.c.bf16 %v1228, %v1228
    %v1245 = vpack.c.bf16 %v1229, %v1229
    %v1246 = vpack.c.bf16 %v1230, %v1230
    %v1247 = vunpack.c.l.bf16 %v192
    %v1248 = vunpack.c.l.bf16 %v206
    %v1249 = vunpack.c.l.bf16 %v220
    %v1250 = vunpack.c.l.bf16 %v234
    %v1251 = vunpack.c.l.bf16 %v248
    %v1252 = vunpack.c.l.bf16 %v262
    %v1253 = vunpack.c.l.bf16 %v276
    %v1254 = vunpack.c.l.bf16 %v290
    %v1255 = vunpack.c.l.bf16 %v304
    %v1256 = vunpack.c.l.bf16 %v318
    %v1257 = vunpack.c.l.bf16 %v332
    %v1258 = vunpack.c.l.bf16 %v346
    %v1259 = vunpack.c.l.bf16 %v360
    %v1260 = vunpack.c.l.bf16 %v374
    %v1261 = vunpack.c.l.bf16 %v388
    %v1262 = vunpack.c.l.bf16 %v402
    %v1263 = vmax.f32 %v1247, 0.0
    %v1264 = vmax.f32 %v1248, 0.0
    %v1265 = vmax.f32 %v1249, 0.0
    %v1266 = vmax.f32 %v1250, 0.0
    %v1267 = vmax.f32 %v1251, 0.0
    %v1268 = vmax.f32 %v1252, 0.0
    %v1269 = vmax.f32 %v1253, 0.0
    %v1270 = vmax.f32 %v1254, 0.0
    %v1271 = vmax.f32 %v1255, 0.0
    %v1272 = vmax.f32 %v1256, 0.0
    %v1273 = vmax.f32 %v1257, 0.0
    %v1274 = vmax.f32 %v1258, 0.0
    %v1275 = vmax.f32 %v1259, 0.0
    %v1276 = vmax.f32 %v1260, 0.0
    %v1277 = vmax.f32 %v1261, 0.0
    %v1278 = vmax.f32 %v1262, 0.0
    %v1279 = vpack.c.bf16 %v1263, %v1263
    %v1280 = vpack.c.bf16 %v1264, %v1264
    %v1281 = vpack.c.bf16 %v1265, %v1265
    %v1282 = vpack.c.bf16 %v1266, %v1266
    %v1283 = vpack.c.bf16 %v1267, %v1267
    %v1284 = vpack.c.bf16 %v1268, %v1268
    %v1285 = vpack.c.bf16 %v1269, %v1269
    %v1286 = vpack.c.bf16 %v1270, %v1270
    %v1287 = vpack.c.bf16 %v1271, %v1271
    %v1288 = vpack.c.bf16 %v1272, %v1272
    %v1289 = vpack.c.bf16 %v1273, %v1273
    %v1290 = vpack.c.bf16 %v1274, %v1274
    %v1291 = vpack.c.bf16 %v1275, %v1275
    %v1292 = vpack.c.bf16 %v1276, %v1276
    %v1293 = vpack.c.bf16 %v1277, %v1277
    %v1294 = vpack.c.bf16 %v1278, %v1278
    %v1295 = vunpack.c.l.bf16 %v432
    %v1296 = vunpack.c.l.bf16 %v446
    %v1297 = vunpack.c.l.bf16 %v460
    %v1298 = vunpack.c.l.bf16 %v474
    %v1299 = vunpack.c.l.bf16 %v488
    %v1300 = vunpack.c.l.bf16 %v502
    %v1301 = vunpack.c.l.bf16 %v516
    %v1302 = vunpack.c.l.bf16 %v530
    %v1303 = vunpack.c.l.bf16 %v544
    %v1304 = vunpack.c.l.bf16 %v558
    %v1305 = vunpack.c.l.bf16 %v572
    %v1306 = vunpack.c.l.bf16 %v586
    %v1307 = vunpack.c.l.bf16 %v600
    %v1308 = vunpack.c.l.bf16 %v614
    %v1309 = vunpack.c.l.bf16 %v628
    %v1310 = vunpack.c.l.bf16 %v642
    %v1311 = vmax.f32 %v1295, 0.0
    %v1312 = vmax.f32 %v1296, 0.0
    %v1313 = vmax.f32 %v1297, 0.0
    %v1314 = vmax.f32 %v1298, 0.0
    %v1315 = vmax.f32 %v1299, 0.0
    %v1316 = vmax.f32 %v1300, 0.0
    %v1317 = vmax.f32 %v1301, 0.0
    %v1318 = vmax.f32 %v1302, 0.0
    %v1319 = vmax.f32 %v1303, 0.0
    %v1320 = vmax.f32 %v1304, 0.0
    %v1321 = vmax.f32 %v1305, 0.0
    %v1322 = vmax.f32 %v1306, 0.0
    %v1323 = vmax.f32 %v1307, 0.0
    %v1324 = vmax.f32 %v1308, 0.0
    %v1325 = vmax.f32 %v1309, 0.0
    %v1326 = vmax.f32 %v1310, 0.0
    %v1327 = vpack.c.bf16 %v1311, %v1311
    %v1328 = vpack.c.bf16 %v1312, %v1312
    %v1329 = vpack.c.bf16 %v1313, %v1313
    %v1330 = vpack.c.bf16 %v1314, %v1314
    %v1331 = vpack.c.bf16 %v1315, %v1315
    %v1332 = vpack.c.bf16 %v1316, %v1316
    %v1333 = vpack.c.bf16 %v1317, %v1317
    %v1334 = vpack.c.bf16 %v1318, %v1318
    %v1335 = vpack.c.bf16 %v1319, %v1319
    %v1336 = vpack.c.bf16 %v1320, %v1320
    %v1337 = vpack.c.bf16 %v1321, %v1321
    %v1338 = vpack.c.bf16 %v1322, %v1322
    %v1339 = vpack.c.bf16 %v1323, %v1323
    %v1340 = vpack.c.bf16 %v1324, %v1324
    %v1341 = vpack.c.bf16 %v1325, %v1325
    %v1342 = vpack.c.bf16 %v1326, %v1326
    %v1343 = vunpack.c.l.bf16 %v72
    %v1344 = vunpack.c.l.bf16 %v74
    %v1345 = vunpack.c.l.bf16 %v76
    %v1346 = vunpack.c.l.bf16 %v78
    %v1347 = vunpack.c.l.bf16 %v80
    %v1348 = vunpack.c.l.bf16 %v82
    %v1349 = vunpack.c.l.bf16 %v84
    %v1350 = vunpack.c.l.bf16 %v86
    %v1351 = vunpack.c.l.bf16 %v88
    %v1352 = vunpack.c.l.bf16 %v90
    %v1353 = vunpack.c.l.bf16 %v92
    %v1354 = vunpack.c.l.bf16 %v94
    %v1355 = vunpack.c.l.bf16 %v96
    %v1356 = vunpack.c.l.bf16 %v98
    %v1357 = vunpack.c.l.bf16 %v100
    %v1358 = vunpack.c.l.bf16 %v102
    %v1359 = vmax.f32 %v1343, 0.0
    %v1360 = vmax.f32 %v1344, 0.0
    %v1361 = vmax.f32 %v1345, 0.0
    %v1362 = vmax.f32 %v1346, 0.0
    %v1363 = vmax.f32 %v1347, 0.0
    %v1364 = vmax.f32 %v1348, 0.0
    %v1365 = vmax.f32 %v1349, 0.0
    %v1366 = vmax.f32 %v1350, 0.0
    %v1367 = vmax.f32 %v1351, 0.0
    %v1368 = vmax.f32 %v1352, 0.0
    %v1369 = vmax.f32 %v1353, 0.0
    %v1370 = vmax.f32 %v1354, 0.0
    %v1371 = vmax.f32 %v1355, 0.0
    %v1372 = vmax.f32 %v1356, 0.0
    %v1373 = vmax.f32 %v1357, 0.0
    %v1374 = vmax.f32 %v1358, 0.0
    %v1375 = vpack.c.bf16 %v1359, %v1359
    %v1376 = vpack.c.bf16 %v1360, %v1360
    %v1377 = vpack.c.bf16 %v1361, %v1361
    %v1378 = vpack.c.bf16 %v1362, %v1362
    %v1379 = vpack.c.bf16 %v1363, %v1363
    %v1380 = vpack.c.bf16 %v1364, %v1364
    %v1381 = vpack.c.bf16 %v1365, %v1365
    %v1382 = vpack.c.bf16 %v1366, %v1366
    %v1383 = vpack.c.bf16 %v1367, %v1367
    %v1384 = vpack.c.bf16 %v1368, %v1368
    %v1385 = vpack.c.bf16 %v1369, %v1369
    %v1386 = vpack.c.bf16 %v1370, %v1370
    %v1387 = vpack.c.bf16 %v1371, %v1371
    %v1388 = vpack.c.bf16 %v1372, %v1372
    %v1389 = vpack.c.bf16 %v1373, %v1373
    %v1390 = vpack.c.bf16 %v1374, %v1374
    %v1391 = vunpack.c.l.bf16 %v672
    %v1392 = vunpack.c.l.bf16 %v686
    %v1393 = vunpack.c.l.bf16 %v700
    %v1394 = vunpack.c.l.bf16 %v714
    %v1395 = vunpack.c.l.bf16 %v728
    %v1396 = vunpack.c.l.bf16 %v742
    %v1397 = vunpack.c.l.bf16 %v756
    %v1398 = vunpack.c.l.bf16 %v770
    %v1399 = vunpack.c.l.bf16 %v784
    %v1400 = vunpack.c.l.bf16 %v798
    %v1401 = vunpack.c.l.bf16 %v812
    %v1402 = vunpack.c.l.bf16 %v826
    %v1403 = vunpack.c.l.bf16 %v840
    %v1404 = vunpack.c.l.bf16 %v854
    %v1405 = vunpack.c.l.bf16 %v868
    %v1406 = vunpack.c.l.bf16 %v882
    %v1407 = vmax.f32 %v1391, 0.0
    %v1408 = vmax.f32 %v1392, 0.0
    %v1409 = vmax.f32 %v1393, 0.0
    %v1410 = vmax.f32 %v1394, 0.0
    %v1411 = vmax.f32 %v1395, 0.0
    %v1412 = vmax.f32 %v1396, 0.0
    %v1413 = vmax.f32 %v1397, 0.0
    %v1414 = vmax.f32 %v1398, 0.0
    %v1415 = vmax.f32 %v1399, 0.0
    %v1416 = vmax.f32 %v1400, 0.0
    %v1417 = vmax.f32 %v1401, 0.0
    %v1418 = vmax.f32 %v1402, 0.0
    %v1419 = vmax.f32 %v1403, 0.0
    %v1420 = vmax.f32 %v1404, 0.0
    %v1421 = vmax.f32 %v1405, 0.0
    %v1422 = vmax.f32 %v1406, 0.0
    %v1423 = vpack.c.bf16 %v1407, %v1407
    %v1424 = vpack.c.bf16 %v1408, %v1408
    %v1425 = vpack.c.bf16 %v1409, %v1409
    %v1426 = vpack.c.bf16 %v1410, %v1410
    %v1427 = vpack.c.bf16 %v1411, %v1411
    %v1428 = vpack.c.bf16 %v1412, %v1412
    %v1429 = vpack.c.bf16 %v1413, %v1413
    %v1430 = vpack.c.bf16 %v1414, %v1414
    %v1431 = vpack.c.bf16 %v1415, %v1415
    %v1432 = vpack.c.bf16 %v1416, %v1416
    %v1433 = vpack.c.bf16 %v1417, %v1417
    %v1434 = vpack.c.bf16 %v1418, %v1418
    %v1435 = vpack.c.bf16 %v1419, %v1419
    %v1436 = vpack.c.bf16 %v1420, %v1420
    %v1437 = vpack.c.bf16 %v1421, %v1421
    %v1438 = vpack.c.bf16 %v1422, %v1422
    %v1439 = vunpack.c.l.bf16 %v912
    %v1440 = vunpack.c.l.bf16 %v926
    %v1441 = vunpack.c.l.bf16 %v940
    %v1442 = vunpack.c.l.bf16 %v954
    %v1443 = vunpack.c.l.bf16 %v968
    %v1444 = vunpack.c.l.bf16 %v982
    %v1445 = vunpack.c.l.bf16 %v996
    %v1446 = vunpack.c.l.bf16 %v1010
    %v1447 = vunpack.c.l.bf16 %v1024
    %v1448 = vunpack.c.l.bf16 %v1038
    %v1449 = vunpack.c.l.bf16 %v1052
    %v1450 = vunpack.c.l.bf16 %v1066
    %v1451 = vunpack.c.l.bf16 %v1080
    %v1452 = vunpack.c.l.bf16 %v1094
    %v1453 = vunpack.c.l.bf16 %v1108
    %v1454 = vunpack.c.l.bf16 %v1122
    %v1455 = vmax.f32 %v1439, 0.0
    %v1456 = vmax.f32 %v1440, 0.0
    %v1457 = vmax.f32 %v1441, 0.0
    %v1458 = vmax.f32 %v1442, 0.0
    %v1459 = vmax.f32 %v1443, 0.0
    %v1460 = vmax.f32 %v1444, 0.0
    %v1461 = vmax.f32 %v1445, 0.0
    %v1462 = vmax.f32 %v1446, 0.0
    %v1463 = vmax.f32 %v1447, 0.0
    %v1464 = vmax.f32 %v1448, 0.0
    %v1465 = vmax.f32 %v1449, 0.0
    %v1466 = vmax.f32 %v1450, 0.0
    %v1467 = vmax.f32 %v1451, 0.0
    %v1468 = vmax.f32 %v1452, 0.0
    %v1469 = vmax.f32 %v1453, 0.0
    %v1470 = vmax.f32 %v1454, 0.0
    %v1471 = vpack.c.bf16 %v1455, %v1455
    %v1472 = vpack.c.bf16 %v1456, %v1456
    %v1473 = vpack.c.bf16 %v1457, %v1457
    %v1474 = vpack.c.bf16 %v1458, %v1458
    %v1475 = vpack.c.bf16 %v1459, %v1459
    %v1476 = vpack.c.bf16 %v1460, %v1460
    %v1477 = vpack.c.bf16 %v1461, %v1461
    %v1478 = vpack.c.bf16 %v1462, %v1462
    %v1479 = vpack.c.bf16 %v1463, %v1463
    %v1480 = vpack.c.bf16 %v1464, %v1464
    %v1481 = vpack.c.bf16 %v1465, %v1465
    %v1482 = vpack.c.bf16 %v1466, %v1466
    %v1483 = vpack.c.bf16 %v1467, %v1467
    %v1484 = vpack.c.bf16 %v1468, %v1468
    %v1485 = vpack.c.bf16 %v1469, %v1469
    %v1486 = vpack.c.bf16 %v1470, %v1470
    %v1487 = vunpack.c.l.bf16 %v156
    %v1488 = vunpack.c.l.bf16 %v174
    %v1489 = vmax.f32 %v1487, 0.0
    %v1490 = vmax.f32 %v1488, 0.0
    %v1491 = vpack.c.bf16 %v1489, %v1489
    %v1492 = vpack.c.bf16 %v1490, %v1490
    %v1493 = vunpack.c.l.bf16 %v1152
    %v1494 = vunpack.c.l.bf16 %v1166
    %v1495 = vmax.f32 %v1493, 0.0
    %v1496 = vmax.f32 %v1494, 0.0
    %v1497 = vpack.c.bf16 %v1495, %v1495
    %v1498 = vpack.c.bf16 %v1496, %v1496
    %v1499 = vunpack.c.l.bf16 %v1182
    %v1500 = vunpack.c.l.bf16 %v1196
    %v1501 = vmax.f32 %v1499, 0.0
    %v1502 = vmax.f32 %v1500, 0.0
    %v1503 = vpack.c.bf16 %v1501, %v1501
    %v1504 = vpack.c.bf16 %v1502, %v1502
    %v1521 = vunpack.c.l.b16 %v1231
    %v1522 = vunpack.c.l.b16 %v1232
    %v1523 = vunpack.c.l.b16 %v1233
    %v1524 = vunpack.c.l.b16 %v1234
    %v1525 = vunpack.c.l.b16 %v1235
    %v1526 = vunpack.c.l.b16 %v1236
    %v1527 = vunpack.c.l.b16 %v1237
    %v1528 = vunpack.c.l.b16 %v1238
    %v1529 = vunpack.c.l.b16 %v1239
    %v1530 = vunpack.c.l.b16 %v1240
    %v1531 = vunpack.c.l.b16 %v1241
    %v1532 = vunpack.c.l.b16 %v1242
    %v1533 = vunpack.c.l.b16 %v1243
    %v1534 = vunpack.c.l.b16 %v1244
    %v1535 = vunpack.c.l.b16 %v1245
    %v1536 = vunpack.c.l.b16 %v1246
    %v1537 = vpack.c.b16 %v1522, %v1521
    %v1538 = vpack.c.b16 %v1524, %v1523
    %v1539 = vpack.c.b16 %v1526, %v1525
    %v1540 = vpack.c.b16 %v1528, %v1527
    %v1541 = vpack.c.b16 %v1530, %v1529
    %v1542 = vpack.c.b16 %v1532, %v1531
    %v1543 = vpack.c.b16 %v1534, %v1533
    %v1544 = vpack.c.b16 %v1536, %v1535
    %v1561 = vunpack.c.l.b16 %v1279
    %v1562 = vunpack.c.l.b16 %v1280
    %v1563 = vunpack.c.l.b16 %v1281
    %v1564 = vunpack.c.l.b16 %v1282
    %v1565 = vunpack.c.l.b16 %v1283
    %v1566 = vunpack.c.l.b16 %v1284
    %v1567 = vunpack.c.l.b16 %v1285
    %v1568 = vunpack.c.l.b16 %v1286
    %v1569 = vunpack.c.l.b16 %v1287
    %v1570 = vunpack.c.l.b16 %v1288
    %v1571 = vunpack.c.l.b16 %v1289
    %v1572 = vunpack.c.l.b16 %v1290
    %v1573 = vunpack.c.l.b16 %v1291
    %v1574 = vunpack.c.l.b16 %v1292
    %v1575 = vunpack.c.l.b16 %v1293
    %v1576 = vunpack.c.l.b16 %v1294
    %v1577 = vpack.c.b16 %v1562, %v1561
    %v1578 = vpack.c.b16 %v1564, %v1563
    %v1579 = vpack.c.b16 %v1566, %v1565
    %v1580 = vpack.c.b16 %v1568, %v1567
    %v1581 = vpack.c.b16 %v1570, %v1569
    %v1582 = vpack.c.b16 %v1572, %v1571
    %v1583 = vpack.c.b16 %v1574, %v1573
    %v1584 = vpack.c.b16 %v1576, %v1575
    %1585 = vrot.lane.b32.xlu0 %v1577, 4
    %v1586 = vpop.permute.xlu0 %1585
    %1587 = vrot.lane.b32.xlu0 %v1578, 4
    %v1588 = vpop.permute.xlu0 %1587
    %1589 = vrot.lane.b32.xlu0 %v1579, 4
    %v1590 = vpop.permute.xlu0 %1589
    %1591 = vrot.lane.b32.xlu0 %v1580, 4
    %v1592 = vpop.permute.xlu0 %1591
    %1593 = vrot.lane.b32.xlu0 %v1581, 4
    %v1594 = vpop.permute.xlu0 %1593
    %1595 = vrot.lane.b32.xlu0 %v1582, 4
    %v1596 = vpop.permute.xlu0 %1595
    %1597 = vrot.lane.b32.xlu0 %v1583, 4
    %v1598 = vpop.permute.xlu0 %1597
    %1599 = vrot.lane.b32.xlu0 %v1584, 4
    %v1600 = vpop.permute.xlu0 %1599
    %v1617 = vunpack.c.l.b16 %v1327
    %v1618 = vunpack.c.l.b16 %v1328
    %v1619 = vunpack.c.l.b16 %v1329
    %v1620 = vunpack.c.l.b16 %v1330
    %v1621 = vunpack.c.l.b16 %v1331
    %v1622 = vunpack.c.l.b16 %v1332
    %v1623 = vunpack.c.l.b16 %v1333
    %v1624 = vunpack.c.l.b16 %v1334
    %v1625 = vunpack.c.l.b16 %v1335
    %v1626 = vunpack.c.l.b16 %v1336
    %v1627 = vunpack.c.l.b16 %v1337
    %v1628 = vunpack.c.l.b16 %v1338
    %v1629 = vunpack.c.l.b16 %v1339
    %v1630 = vunpack.c.l.b16 %v1340
    %v1631 = vunpack.c.l.b16 %v1341
    %v1632 = vunpack.c.l.b16 %v1342
    %v1633 = vpack.c.b16 %v1618, %v1617
    %v1634 = vpack.c.b16 %v1620, %v1619
    %v1635 = vpack.c.b16 %v1622, %v1621
    %v1636 = vpack.c.b16 %v1624, %v1623
    %v1637 = vpack.c.b16 %v1626, %v1625
    %v1638 = vpack.c.b16 %v1628, %v1627
    %v1639 = vpack.c.b16 %v1630, %v1629
    %v1640 = vpack.c.b16 %v1632, %v1631
    %1641 = vrot.lane.b32.xlu0 %v1633, 8
    %v1642 = vpop.permute.xlu0 %1641
    %1643 = vrot.lane.b32.xlu0 %v1634, 8
    %v1644 = vpop.permute.xlu0 %1643
    %1645 = vrot.lane.b32.xlu0 %v1635, 8
    %v1646 = vpop.permute.xlu0 %1645
    %1647 = vrot.lane.b32.xlu0 %v1636, 8
    %v1648 = vpop.permute.xlu0 %1647
    %1649 = vrot.lane.b32.xlu0 %v1637, 8
    %v1650 = vpop.permute.xlu0 %1649
    %1651 = vrot.lane.b32.xlu0 %v1638, 8
    %v1652 = vpop.permute.xlu0 %1651
    %1653 = vrot.lane.b32.xlu0 %v1639, 8
    %v1654 = vpop.permute.xlu0 %1653
    %1655 = vrot.lane.b32.xlu0 %v1640, 8
    %v1656 = vpop.permute.xlu0 %1655
    %v1673 = vunpack.c.l.b16 %v1375
    %v1674 = vunpack.c.l.b16 %v1376
    %v1675 = vunpack.c.l.b16 %v1377
    %v1676 = vunpack.c.l.b16 %v1378
    %v1677 = vunpack.c.l.b16 %v1379
    %v1678 = vunpack.c.l.b16 %v1380
    %v1679 = vunpack.c.l.b16 %v1381
    %v1680 = vunpack.c.l.b16 %v1382
    %v1681 = vunpack.c.l.b16 %v1383
    %v1682 = vunpack.c.l.b16 %v1384
    %v1683 = vunpack.c.l.b16 %v1385
    %v1684 = vunpack.c.l.b16 %v1386
    %v1685 = vunpack.c.l.b16 %v1387
    %v1686 = vunpack.c.l.b16 %v1388
    %v1687 = vunpack.c.l.b16 %v1389
    %v1688 = vunpack.c.l.b16 %v1390
    %v1689 = vpack.c.b16 %v1674, %v1673
    %v1690 = vpack.c.b16 %v1676, %v1675
    %v1691 = vpack.c.b16 %v1678, %v1677
    %v1692 = vpack.c.b16 %v1680, %v1679
    %v1693 = vpack.c.b16 %v1682, %v1681
    %v1694 = vpack.c.b16 %v1684, %v1683
    %v1695 = vpack.c.b16 %v1686, %v1685
    %v1696 = vpack.c.b16 %v1688, %v1687
    %1697 = vrot.lane.b32.xlu0 %v1689, 12
    %v1698 = vpop.permute.xlu0 %1697
    %1699 = vrot.lane.b32.xlu0 %v1690, 12
    %v1700 = vpop.permute.xlu0 %1699
    %1701 = vrot.lane.b32.xlu0 %v1691, 12
    %v1702 = vpop.permute.xlu0 %1701
    %1703 = vrot.lane.b32.xlu0 %v1692, 12
    %v1704 = vpop.permute.xlu0 %1703
    %1705 = vrot.lane.b32.xlu0 %v1693, 12
    %v1706 = vpop.permute.xlu0 %1705
    %1707 = vrot.lane.b32.xlu0 %v1694, 12
    %v1708 = vpop.permute.xlu0 %1707
    %1709 = vrot.lane.b32.xlu0 %v1695, 12
    %v1710 = vpop.permute.xlu0 %1709
    %1711 = vrot.lane.b32.xlu0 %v1696, 12
    %v1712 = vpop.permute.xlu0 %1711
    %v1729 = vunpack.c.l.b16 %v1423
    %v1730 = vunpack.c.l.b16 %v1424
    %v1731 = vunpack.c.l.b16 %v1425
    %v1732 = vunpack.c.l.b16 %v1426
    %v1733 = vunpack.c.l.b16 %v1427
    %v1734 = vunpack.c.l.b16 %v1428
    %v1735 = vunpack.c.l.b16 %v1429
    %v1736 = vunpack.c.l.b16 %v1430
    %v1737 = vunpack.c.l.b16 %v1431
    %v1738 = vunpack.c.l.b16 %v1432
    %v1739 = vunpack.c.l.b16 %v1433
    %v1740 = vunpack.c.l.b16 %v1434
    %v1741 = vunpack.c.l.b16 %v1435
    %v1742 = vunpack.c.l.b16 %v1436
    %v1743 = vunpack.c.l.b16 %v1437
    %v1744 = vunpack.c.l.b16 %v1438
    %v1745 = vpack.c.b16 %v1730, %v1729
    %v1746 = vpack.c.b16 %v1732, %v1731
    %v1747 = vpack.c.b16 %v1734, %v1733
    %v1748 = vpack.c.b16 %v1736, %v1735
    %v1749 = vpack.c.b16 %v1738, %v1737
    %v1750 = vpack.c.b16 %v1740, %v1739
    %v1751 = vpack.c.b16 %v1742, %v1741
    %v1752 = vpack.c.b16 %v1744, %v1743
    %1753 = vrot.lane.b32.xlu0 %v1745, 16
    %v1754 = vpop.permute.xlu0 %1753
    %1755 = vrot.lane.b32.xlu0 %v1746, 16
    %v1756 = vpop.permute.xlu0 %1755
    %1757 = vrot.lane.b32.xlu0 %v1747, 16
    %v1758 = vpop.permute.xlu0 %1757
    %1759 = vrot.lane.b32.xlu0 %v1748, 16
    %v1760 = vpop.permute.xlu0 %1759
    %1761 = vrot.lane.b32.xlu0 %v1749, 16
    %v1762 = vpop.permute.xlu0 %1761
    %1763 = vrot.lane.b32.xlu0 %v1750, 16
    %v1764 = vpop.permute.xlu0 %1763
    %1765 = vrot.lane.b32.xlu0 %v1751, 16
    %v1766 = vpop.permute.xlu0 %1765
    %1767 = vrot.lane.b32.xlu0 %v1752, 16
    %v1768 = vpop.permute.xlu0 %1767
    %v1785 = vunpack.c.l.b16 %v1471
    %v1786 = vunpack.c.l.b16 %v1472
    %v1787 = vunpack.c.l.b16 %v1473
    %v1788 = vunpack.c.l.b16 %v1474
    %v1789 = vunpack.c.l.b16 %v1475
    %v1790 = vunpack.c.l.b16 %v1476
    %v1791 = vunpack.c.l.b16 %v1477
    %v1792 = vunpack.c.l.b16 %v1478
    %v1793 = vunpack.c.l.b16 %v1479
    %v1794 = vunpack.c.l.b16 %v1480
    %v1795 = vunpack.c.l.b16 %v1481
    %v1796 = vunpack.c.l.b16 %v1482
    %v1797 = vunpack.c.l.b16 %v1483
    %v1798 = vunpack.c.l.b16 %v1484
    %v1799 = vunpack.c.l.b16 %v1485
    %v1800 = vunpack.c.l.b16 %v1486
    %v1801 = vpack.c.b16 %v1786, %v1785
    %v1802 = vpack.c.b16 %v1788, %v1787
    %v1803 = vpack.c.b16 %v1790, %v1789
    %v1804 = vpack.c.b16 %v1792, %v1791
    %v1805 = vpack.c.b16 %v1794, %v1793
    %v1806 = vpack.c.b16 %v1796, %v1795
    %v1807 = vpack.c.b16 %v1798, %v1797
    %v1808 = vpack.c.b16 %v1800, %v1799
    %1809 = vrot.lane.b32.xlu0 %v1801, 20
    %v1810 = vpop.permute.xlu0 %1809
    %1811 = vrot.lane.b32.xlu0 %v1802, 20
    %v1812 = vpop.permute.xlu0 %1811
    %1813 = vrot.lane.b32.xlu0 %v1803, 20
    %v1814 = vpop.permute.xlu0 %1813
    %1815 = vrot.lane.b32.xlu0 %v1804, 20
    %v1816 = vpop.permute.xlu0 %1815
    %1817 = vrot.lane.b32.xlu0 %v1805, 20
    %v1818 = vpop.permute.xlu0 %1817
    %1819 = vrot.lane.b32.xlu0 %v1806, 20
    %v1820 = vpop.permute.xlu0 %1819
    %1821 = vrot.lane.b32.xlu0 %v1807, 20
    %v1822 = vpop.permute.xlu0 %1821
    %1823 = vrot.lane.b32.xlu0 %v1808, 20
    %v1824 = vpop.permute.xlu0 %1823
    %v1827 = vunpack.c.l.b16 %v1491
    %v1828 = vunpack.c.l.b16 %v1492
    %v1829 = vpack.c.b16 %v1523, %v1522
    %v1830 = vpack.c.b16 %v1525, %v1524
    %v1831 = vpack.c.b16 %v1527, %v1526
    %v1832 = vpack.c.b16 %v1827, %v1528
    %v1833 = vpack.c.b16 %v1531, %v1530
    %v1834 = vpack.c.b16 %v1533, %v1532
    %v1835 = vpack.c.b16 %v1535, %v1534
    %v1836 = vpack.c.b16 %v1828, %v1536
    %1837 = vrot.lane.b32.xlu0 %v1829, 24
    %v1838 = vpop.permute.xlu0 %1837
    %1839 = vrot.lane.b32.xlu0 %v1830, 24
    %v1840 = vpop.permute.xlu0 %1839
    %1841 = vrot.lane.b32.xlu0 %v1831, 24
    %v1842 = vpop.permute.xlu0 %1841
    %1843 = vrot.lane.b32.xlu0 %v1832, 24
    %v1844 = vpop.permute.xlu0 %1843
    %1845 = vrot.lane.b32.xlu0 %v1833, 24
    %v1846 = vpop.permute.xlu0 %1845
    %1847 = vrot.lane.b32.xlu0 %v1834, 24
    %v1848 = vpop.permute.xlu0 %1847
    %1849 = vrot.lane.b32.xlu0 %v1835, 24
    %v1850 = vpop.permute.xlu0 %1849
    %1851 = vrot.lane.b32.xlu0 %v1836, 24
    %v1852 = vpop.permute.xlu0 %1851
    %v1855 = vunpack.c.l.b16 %v1497
    %v1856 = vunpack.c.l.b16 %v1498
    %v1857 = vpack.c.b16 %v1563, %v1562
    %v1858 = vpack.c.b16 %v1565, %v1564
    %v1859 = vpack.c.b16 %v1567, %v1566
    %v1860 = vpack.c.b16 %v1855, %v1568
    %v1861 = vpack.c.b16 %v1571, %v1570
    %v1862 = vpack.c.b16 %v1573, %v1572
    %v1863 = vpack.c.b16 %v1575, %v1574
    %v1864 = vpack.c.b16 %v1856, %v1576
    %1865 = vrot.lane.b32.xlu0 %v1857, 28
    %v1866 = vpop.permute.xlu0 %1865
    %1867 = vrot.lane.b32.xlu0 %v1858, 28
    %v1868 = vpop.permute.xlu0 %1867
    %1869 = vrot.lane.b32.xlu0 %v1859, 28
    %v1870 = vpop.permute.xlu0 %1869
    %1871 = vrot.lane.b32.xlu0 %v1860, 28
    %v1872 = vpop.permute.xlu0 %1871
    %1873 = vrot.lane.b32.xlu0 %v1861, 28
    %v1874 = vpop.permute.xlu0 %1873
    %1875 = vrot.lane.b32.xlu0 %v1862, 28
    %v1876 = vpop.permute.xlu0 %1875
    %1877 = vrot.lane.b32.xlu0 %v1863, 28
    %v1878 = vpop.permute.xlu0 %1877
    %1879 = vrot.lane.b32.xlu0 %v1864, 28
    %v1880 = vpop.permute.xlu0 %1879
    %v1883 = vunpack.c.l.b16 %v1503
    %v1884 = vunpack.c.l.b16 %v1504
    %v1885 = vpack.c.b16 %v1619, %v1618
    %v1886 = vpack.c.b16 %v1621, %v1620
    %v1887 = vpack.c.b16 %v1623, %v1622
    %v1888 = vpack.c.b16 %v1883, %v1624
    %v1889 = vpack.c.b16 %v1627, %v1626
    %v1890 = vpack.c.b16 %v1629, %v1628
    %v1891 = vpack.c.b16 %v1631, %v1630
    %v1892 = vpack.c.b16 %v1884, %v1632
    %1893 = vrot.lane.b32.xlu0 %v1885, 32
    %v1894 = vpop.permute.xlu0 %1893
    %1895 = vrot.lane.b32.xlu0 %v1886, 32
    %v1896 = vpop.permute.xlu0 %1895
    %1897 = vrot.lane.b32.xlu0 %v1887, 32
    %v1898 = vpop.permute.xlu0 %1897
    %1899 = vrot.lane.b32.xlu0 %v1888, 32
    %v1900 = vpop.permute.xlu0 %1899
    %1901 = vrot.lane.b32.xlu0 %v1889, 32
    %v1902 = vpop.permute.xlu0 %1901
    %1903 = vrot.lane.b32.xlu0 %v1890, 32
    %v1904 = vpop.permute.xlu0 %1903
    %1905 = vrot.lane.b32.xlu0 %v1891, 32
    %v1906 = vpop.permute.xlu0 %1905
    %1907 = vrot.lane.b32.xlu0 %v1892, 32
    %v1908 = vpop.permute.xlu0 %1907
    %vm1909 = vcmask 31744
    %v1912 = vsel %vm1909, %v1537, %v1586
    %v1915 = vsel %vm1909, %v1538, %v1588
    %v1918 = vsel %vm1909, %v1539, %v1590
    %v1921 = vsel %vm1909, %v1540, %v1592
    %v1924 = vsel %vm1909, %v1541, %v1594
    %v1927 = vsel %vm1909, %v1542, %v1596
    %v1930 = vsel %vm1909, %v1543, %v1598
    %v1933 = vsel %vm1909, %v1544, %v1600
    %vm1934 = vcmask 64512
    %v1936 = vsel %vm1934, %v1912, %v1642
    %v1938 = vsel %vm1934, %v1915, %v1644
    %v1940 = vsel %vm1934, %v1918, %v1646
    %v1942 = vsel %vm1934, %v1921, %v1648
    %v1944 = vsel %vm1934, %v1924, %v1650
    %v1946 = vsel %vm1934, %v1927, %v1652
    %v1948 = vsel %vm1934, %v1930, %v1654
    %v1950 = vsel %vm1934, %v1933, %v1656
    %vm1951 = vcmask 97280
    %v1953 = vsel %vm1951, %v1936, %v1698
    %v1955 = vsel %vm1951, %v1938, %v1700
    %v1957 = vsel %vm1951, %v1940, %v1702
    %v1959 = vsel %vm1951, %v1942, %v1704
    %v1961 = vsel %vm1951, %v1944, %v1706
    %v1963 = vsel %vm1951, %v1946, %v1708
    %v1965 = vsel %vm1951, %v1948, %v1710
    %v1967 = vsel %vm1951, %v1950, %v1712
    %vm1968 = vcmask 130048
    %v1970 = vsel %vm1968, %v1953, %v1754
    %v1972 = vsel %vm1968, %v1955, %v1756
    %v1974 = vsel %vm1968, %v1957, %v1758
    %v1976 = vsel %vm1968, %v1959, %v1760
    %v1978 = vsel %vm1968, %v1961, %v1762
    %v1980 = vsel %vm1968, %v1963, %v1764
    %v1982 = vsel %vm1968, %v1965, %v1766
    %v1984 = vsel %vm1968, %v1967, %v1768
    %vm1985 = vcmask 162816
    %v1987 = vsel %vm1985, %v1970, %v1810
    %v1989 = vsel %vm1985, %v1972, %v1812
    %v1991 = vsel %vm1985, %v1974, %v1814
    %v1993 = vsel %vm1985, %v1976, %v1816
    %v1995 = vsel %vm1985, %v1978, %v1818
    %v1997 = vsel %vm1985, %v1980, %v1820
    %v1999 = vsel %vm1985, %v1982, %v1822
    %v2001 = vsel %vm1985, %v1984, %v1824
    %vm2002 = vcmask 195584
    %v2004 = vsel %vm2002, %v1987, %v1838
    %v2006 = vsel %vm2002, %v1989, %v1840
    %v2008 = vsel %vm2002, %v1991, %v1842
    %v2010 = vsel %vm2002, %v1993, %v1844
    %v2012 = vsel %vm2002, %v1995, %v1846
    %v2014 = vsel %vm2002, %v1997, %v1848
    %v2016 = vsel %vm2002, %v1999, %v1850
    %v2018 = vsel %vm2002, %v2001, %v1852
    %vm2019 = vcmask 228352
    %v2021 = vsel %vm2019, %v2004, %v1866
    %v2023 = vsel %vm2019, %v2006, %v1868
    %v2025 = vsel %vm2019, %v2008, %v1870
    %v2027 = vsel %vm2019, %v2010, %v1872
    %v2029 = vsel %vm2019, %v2012, %v1874
    %v2031 = vsel %vm2019, %v2014, %v1876
    %v2033 = vsel %vm2019, %v2016, %v1878
    %v2035 = vsel %vm2019, %v2018, %v1880
    %vm2036 = vcmask 261120
    %v2038 = vsel %vm2036, %v2021, %v1894
    %v2040 = vsel %vm2036, %v2023, %v1896
    %v2042 = vsel %vm2036, %v2025, %v1898
    %v2044 = vsel %vm2036, %v2027, %v1900
    %v2046 = vsel %vm2036, %v2029, %v1902
    %v2048 = vsel %vm2036, %v2031, %v1904
    %v2050 = vsel %vm2036, %v2033, %v1906
    %v2052 = vsel %vm2036, %v2035, %v1908
    %v2053 = vld [vmem:[%s6] sm:$0xff]
    %v2054 = vld [vmem:[%s6 + $0x8] sm:$0xff]
    %v2055 = vld [vmem:[%s6 + $0x10] sm:$0xff]
    %v2056 = vld [vmem:[%s6 + $0x18] sm:$0xff]
    %v2057 = vld [vmem:[%s6 + $0x20] sm:$0x33]
    %v2063 = vunpack.c.l.b16 %v2053
    %v2064 = vunpack.c.h.b16 %v2053
    %v2065 = vunpack.c.l.b16 %v2054
    %v2066 = vunpack.c.h.b16 %v2054
    %v2067 = vunpack.c.l.b16 %v2055
    %v2068 = vunpack.c.h.b16 %v2055
    %v2069 = vunpack.c.l.b16 %v2056
    %v2070 = vunpack.c.h.b16 %v2056
    %v2071 = vunpack.c.l.b16 %v2057
    %v2072 = vunpack.c.h.b16 %v2057
    %v2073 = vpack.c.b16 %v2065, %v2063
    %v2074 = vpack.c.b16 %v2066, %v2064
    %v2075 = vpack.c.b16 %v2069, %v2067
    %v2076 = vpack.c.b16 %v2070, %v2068
    %v2077 = vpack.c.b16 %v2071, %v2071
    %v2078 = vpack.c.b16 %v2072, %v2072
    %vm2083 = vcmask 293888
    %v2084 = vsel %vm2083, %v2038, 0
    %v2086 = vsel %vm2083, %v2040, 0
    %v2088 = vsel %vm2083, %v2042, 0
    %v2090 = vsel %vm2083, %v2044, 0
    %v2092 = vsel %vm2083, %v2046, 0
    %v2094 = vsel %vm2083, %v2048, 0
    %v2096 = vsel %vm2083, %v2050, 0
    %v2098 = vsel %vm2083, %v2052, 0
    %vm2100 = vcmask 1041408
    %v2102 = vsel %vm2100, %v2077, 0
    %v2105 = vsel %vm2100, %v2078, 0
    %2107 = vmatpush.bf16.msra.mxu0 0
    %2108 = vmatpush.bf16.msra.mxu0 0
    %2109 = vmatpush.bf16.msra.mxu0 0
    %2110 = vmatpush.bf16.msra.mxu0 0
    %2111 = vmatpush.bf16.msra.mxu0 0
    %2112 = vmatpush.bf16.msra.mxu0 %v2102
    %2113 = vmatpush.bf16.msra.mxu0 %v2075
    %2114 = vmatpush.bf16.msra.mxu0 %v2073
    %2115 = vmatmul.bf16.gmra.mxu0 %v2084
    %v2116 = vpop.f32.mrf.mxu0
    %v2117 = vadd.f32 0.0, %v2116
    %v2118 = vpop.f32.mrf.mxu0
    %v2119 = vadd.f32 0.0, %v2118
    %2120 = vmatmul.bf16.gmra.mxu0 %v2086
    %v2121 = vpop.f32.mrf.mxu0
    %v2122 = vadd.f32 0.0, %v2121
    %v2123 = vpop.f32.mrf.mxu0
    %v2124 = vadd.f32 0.0, %v2123
    %2125 = vmatmul.bf16.gmra.mxu0 %v2088
    %v2126 = vpop.f32.mrf.mxu0
    %v2127 = vadd.f32 0.0, %v2126
    %v2128 = vpop.f32.mrf.mxu0
    %v2129 = vadd.f32 0.0, %v2128
    %2130 = vmatmul.bf16.gmra.mxu0 %v2090
    %v2131 = vpop.f32.mrf.mxu0
    %v2132 = vadd.f32 0.0, %v2131
    %v2133 = vpop.f32.mrf.mxu0
    %v2134 = vadd.f32 0.0, %v2133
    %2135 = vmatmul.bf16.gmra.mxu0 %v2092
    %v2136 = vpop.f32.mrf.mxu0
    %v2137 = vadd.f32 0.0, %v2136
    %v2138 = vpop.f32.mrf.mxu0
    %v2139 = vadd.f32 0.0, %v2138
    %2140 = vmatmul.bf16.gmra.mxu0 %v2094
    %v2141 = vpop.f32.mrf.mxu0
    %v2142 = vadd.f32 0.0, %v2141
    %v2143 = vpop.f32.mrf.mxu0
    %v2144 = vadd.f32 0.0, %v2143
    %2145 = vmatmul.bf16.gmra.mxu0 %v2096
    %v2146 = vpop.f32.mrf.mxu0
    %v2147 = vadd.f32 0.0, %v2146
    %v2148 = vpop.f32.mrf.mxu0
    %v2149 = vadd.f32 0.0, %v2148
    %2150 = vmatmul.bf16.gmra.mxu0 %v2098
    %v2151 = vpop.f32.mrf.mxu0
    %v2152 = vadd.f32 0.0, %v2151
    %v2153 = vpop.f32.mrf.mxu0
    %v2154 = vadd.f32 0.0, %v2153
    %2155 = vdwg.mxu0
    %2156 = vmatpush.bf16.msra.mxu0 0
    %2157 = vmatpush.bf16.msra.mxu0 0
    %2158 = vmatpush.bf16.msra.mxu0 0
    %2159 = vmatpush.bf16.msra.mxu0 0
    %2160 = vmatpush.bf16.msra.mxu0 0
    %2161 = vmatpush.bf16.msra.mxu0 %v2105
    %2162 = vmatpush.bf16.msra.mxu0 %v2076
    %2163 = vmatpush.bf16.msra.mxu0 %v2074
    %2164 = vmatmul.bf16.gmra.mxu0 %v2084
    %v2165 = vpop.f32.mrf.mxu0
    %v2166 = vadd.f32 0.0, %v2165
    %v2167 = vpop.f32.mrf.mxu0
    %v2168 = vadd.f32 0.0, %v2167
    %2169 = vmatmul.bf16.gmra.mxu0 %v2086
    %v2170 = vpop.f32.mrf.mxu0
    %v2171 = vadd.f32 0.0, %v2170
    %v2172 = vpop.f32.mrf.mxu0
    %v2173 = vadd.f32 0.0, %v2172
    %2174 = vmatmul.bf16.gmra.mxu0 %v2088
    %v2175 = vpop.f32.mrf.mxu0
    %v2176 = vadd.f32 0.0, %v2175
    %v2177 = vpop.f32.mrf.mxu0
    %v2178 = vadd.f32 0.0, %v2177
    %2179 = vmatmul.bf16.gmra.mxu0 %v2090
    %v2180 = vpop.f32.mrf.mxu0
    %v2181 = vadd.f32 0.0, %v2180
    %v2182 = vpop.f32.mrf.mxu0
    %v2183 = vadd.f32 0.0, %v2182
    %2184 = vmatmul.bf16.gmra.mxu0 %v2092
    %v2185 = vpop.f32.mrf.mxu0
    %v2186 = vadd.f32 0.0, %v2185
    %v2187 = vpop.f32.mrf.mxu0
    %v2188 = vadd.f32 0.0, %v2187
    %2189 = vmatmul.bf16.gmra.mxu0 %v2094
    %v2190 = vpop.f32.mrf.mxu0
    %v2191 = vadd.f32 0.0, %v2190
    %v2192 = vpop.f32.mrf.mxu0
    %v2193 = vadd.f32 0.0, %v2192
    %2194 = vmatmul.bf16.gmra.mxu0 %v2096
    %v2195 = vpop.f32.mrf.mxu0
    %v2196 = vadd.f32 0.0, %v2195
    %v2197 = vpop.f32.mrf.mxu0
    %v2198 = vadd.f32 0.0, %v2197
    %2199 = vmatmul.bf16.gmra.mxu0 %v2098
    %v2200 = vpop.f32.mrf.mxu0
    %v2201 = vadd.f32 0.0, %v2200
    %v2202 = vpop.f32.mrf.mxu0
    %v2203 = vadd.f32 0.0, %v2202
    %2204 = vdwg.mxu0
    %v2205 = vadd.f32 %v2117, %v2119
    %v2206 = vadd.f32 %v2205, %v2122
    %v2207 = vadd.f32 %v2206, %v2124
    %v2208 = vadd.f32 %v2207, %v2127
    %v2209 = vadd.f32 %v2208, %v2129
    %v2210 = vadd.f32 %v2209, %v2132
    %v2211 = vadd.f32 %v2210, %v2134
    %v2212 = vadd.f32 %v2211, %v2137
    %v2213 = vadd.f32 %v2212, %v2139
    %v2214 = vadd.f32 %v2213, %v2142
    %v2215 = vadd.f32 %v2214, %v2144
    %v2216 = vadd.f32 %v2215, %v2147
    %v2217 = vadd.f32 %v2216, %v2149
    %v2218 = vadd.f32 %v2217, %v2152
    %v2219 = vadd.f32 %v2218, %v2154
    %v2220 = vrot.slane %v2219, 4
    %v2221 = vadd.f32 %v2219, %v2220
    %v2222 = vrot.slane %v2221, 2
    %v2223 = vadd.f32 %v2221, %v2222
    %v2224 = vrot.slane %v2223, 1
    %v2225 = vadd.f32 %v2223, %v2224
    %v2226 = vadd.f32 %v2166, %v2168
    %v2227 = vadd.f32 %v2226, %v2171
    %v2228 = vadd.f32 %v2227, %v2173
    %v2229 = vadd.f32 %v2228, %v2176
    %v2230 = vadd.f32 %v2229, %v2178
    %v2231 = vadd.f32 %v2230, %v2181
    %v2232 = vadd.f32 %v2231, %v2183
    %v2233 = vadd.f32 %v2232, %v2186
    %v2234 = vadd.f32 %v2233, %v2188
    %v2235 = vadd.f32 %v2234, %v2191
    %v2236 = vadd.f32 %v2235, %v2193
    %v2237 = vadd.f32 %v2236, %v2196
    %v2238 = vadd.f32 %v2237, %v2198
    %v2239 = vadd.f32 %v2238, %v2201
    %v2240 = vadd.f32 %v2239, %v2203
    %v2241 = vrot.slane %v2240, 4
    %v2242 = vadd.f32 %v2240, %v2241
    %v2243 = vrot.slane %v2242, 2
    %v2244 = vadd.f32 %v2242, %v2243
    %v2245 = vrot.slane %v2244, 1
    %v2246 = vadd.f32 %v2244, %v2245
    %v2247 = vrcp.pop 128.0
    %v2248 = vmul.f32 128.0, %v2247
    %v2249 = vsub.f32 1.0, %v2248
    %v2250 = vmul.f32 %v2247, %v2249
    %v2251 = vadd.f32 %v2247, %v2250
    %vm2252 = vweird.f32 %v2247
    %v2253 = vsel %vm2252, %v2247, %v2251
    %v2254 = vmul.f32 %v2225, %v2253
    %v2255 = vmul.f32 %v2246, %v2253
    %v2256 = vsub.f32 %v2117, %v2254
    %v2257 = vsub.f32 %v2166, %v2255
    %v2258 = vsub.f32 %v2119, %v2254
    %v2259 = vsub.f32 %v2168, %v2255
    %v2260 = vsub.f32 %v2122, %v2254
    %v2261 = vsub.f32 %v2171, %v2255
    %v2262 = vsub.f32 %v2124, %v2254
    %v2263 = vsub.f32 %v2173, %v2255
    %v2264 = vsub.f32 %v2127, %v2254
    %v2265 = vsub.f32 %v2176, %v2255
    %v2266 = vsub.f32 %v2129, %v2254
    %v2267 = vsub.f32 %v2178, %v2255
    %v2268 = vsub.f32 %v2132, %v2254
    %v2269 = vsub.f32 %v2181, %v2255
    %v2270 = vsub.f32 %v2134, %v2254
    %v2271 = vsub.f32 %v2183, %v2255
    %v2272 = vsub.f32 %v2137, %v2254
    %v2273 = vsub.f32 %v2186, %v2255
    %v2274 = vsub.f32 %v2139, %v2254
    %v2275 = vsub.f32 %v2188, %v2255
    %v2276 = vsub.f32 %v2142, %v2254
    %v2277 = vsub.f32 %v2191, %v2255
    %v2278 = vsub.f32 %v2144, %v2254
    %v2279 = vsub.f32 %v2193, %v2255
    %v2280 = vsub.f32 %v2147, %v2254
    %v2281 = vsub.f32 %v2196, %v2255
    %v2282 = vsub.f32 %v2149, %v2254
    %v2283 = vsub.f32 %v2198, %v2255
    %v2284 = vsub.f32 %v2152, %v2254
    %v2285 = vsub.f32 %v2201, %v2255
    %v2286 = vsub.f32 %v2154, %v2254
    %v2287 = vsub.f32 %v2203, %v2255
    %v2288 = vmul.f32 %v2256, %v2256
    %v2289 = vmul.f32 %v2257, %v2257
    %v2290 = vmul.f32 %v2258, %v2258
    %v2291 = vmul.f32 %v2259, %v2259
    %v2292 = vmul.f32 %v2260, %v2260
    %v2293 = vmul.f32 %v2261, %v2261
    %v2294 = vmul.f32 %v2262, %v2262
    %v2295 = vmul.f32 %v2263, %v2263
    %v2296 = vmul.f32 %v2264, %v2264
    %v2297 = vmul.f32 %v2265, %v2265
    %v2298 = vmul.f32 %v2266, %v2266
    %v2299 = vmul.f32 %v2267, %v2267
    %v2300 = vmul.f32 %v2268, %v2268
    %v2301 = vmul.f32 %v2269, %v2269
    %v2302 = vmul.f32 %v2270, %v2270
    %v2303 = vmul.f32 %v2271, %v2271
    %v2304 = vmul.f32 %v2272, %v2272
    %v2305 = vmul.f32 %v2273, %v2273
    %v2306 = vmul.f32 %v2274, %v2274
    %v2307 = vmul.f32 %v2275, %v2275
    %v2308 = vmul.f32 %v2276, %v2276
    %v2309 = vmul.f32 %v2277, %v2277
    %v2310 = vmul.f32 %v2278, %v2278
    %v2311 = vmul.f32 %v2279, %v2279
    %v2312 = vmul.f32 %v2280, %v2280
    %v2313 = vmul.f32 %v2281, %v2281
    %v2314 = vmul.f32 %v2282, %v2282
    %v2315 = vmul.f32 %v2283, %v2283
    %v2316 = vmul.f32 %v2284, %v2284
    %v2317 = vmul.f32 %v2285, %v2285
    %v2318 = vmul.f32 %v2286, %v2286
    %v2319 = vmul.f32 %v2287, %v2287
    %v2320 = vadd.f32 %v2288, %v2290
    %v2321 = vadd.f32 %v2320, %v2292
    %v2322 = vadd.f32 %v2321, %v2294
    %v2323 = vadd.f32 %v2322, %v2296
    %v2324 = vadd.f32 %v2323, %v2298
    %v2325 = vadd.f32 %v2324, %v2300
    %v2326 = vadd.f32 %v2325, %v2302
    %v2327 = vadd.f32 %v2326, %v2304
    %v2328 = vadd.f32 %v2327, %v2306
    %v2329 = vadd.f32 %v2328, %v2308
    %v2330 = vadd.f32 %v2329, %v2310
    %v2331 = vadd.f32 %v2330, %v2312
    %v2332 = vadd.f32 %v2331, %v2314
    %v2333 = vadd.f32 %v2332, %v2316
    %v2334 = vadd.f32 %v2333, %v2318
    %v2335 = vrot.slane %v2334, 4
    %v2336 = vadd.f32 %v2334, %v2335
    %v2337 = vrot.slane %v2336, 2
    %v2338 = vadd.f32 %v2336, %v2337
    %v2339 = vrot.slane %v2338, 1
    %v2340 = vadd.f32 %v2338, %v2339
    %v2341 = vadd.f32 %v2289, %v2291
    %v2342 = vadd.f32 %v2341, %v2293
    %v2343 = vadd.f32 %v2342, %v2295
    %v2344 = vadd.f32 %v2343, %v2297
    %v2345 = vadd.f32 %v2344, %v2299
    %v2346 = vadd.f32 %v2345, %v2301
    %v2347 = vadd.f32 %v2346, %v2303
    %v2348 = vadd.f32 %v2347, %v2305
    %v2349 = vadd.f32 %v2348, %v2307
    %v2350 = vadd.f32 %v2349, %v2309
    %v2351 = vadd.f32 %v2350, %v2311
    %v2352 = vadd.f32 %v2351, %v2313
    %v2353 = vadd.f32 %v2352, %v2315
    %v2354 = vadd.f32 %v2353, %v2317
    %v2355 = vadd.f32 %v2354, %v2319
    %v2356 = vrot.slane %v2355, 4
    %v2357 = vadd.f32 %v2355, %v2356
    %v2358 = vrot.slane %v2357, 2
    %v2359 = vadd.f32 %v2357, %v2358
    %v2360 = vrot.slane %v2359, 1
    %v2361 = vadd.f32 %v2359, %v2360
    %v2362 = vmul.f32 %v2340, %v2253
    %v2363 = vmul.f32 %v2361, %v2253
    %v2364 = vld [vmem:[%s1] sm:$0x3]
    %v2365 = vadd.f32 %v2362, 1e-05
    %v2366 = vadd.f32 %v2363, 1e-05
    %v2367 = vrsqrt.pop %v2365
    %v2368 = vmul.f32 %v2367, %v2365
    %v2369 = vmul.f32 %v2368, %v2367
    %v2370 = vmul.f32 0.5, %v2369
    %v2371 = vsub.f32 1.5, %v2370
    %v2372 = vmul.f32 %v2367, %v2371
    %vm2373 = vweird.f32 %v2365
    %vm2374 = vweird.f32 %v2367
    %vm2375 = vmor %vm2373, %vm2374
    %v2376 = vsel %vm2375, %v2367, %v2372
    %v2377 = vrsqrt.pop %v2366
    %v2378 = vmul.f32 %v2377, %v2366
    %v2379 = vmul.f32 %v2378, %v2377
    %v2380 = vmul.f32 0.5, %v2379
    %v2381 = vsub.f32 1.5, %v2380
    %v2382 = vmul.f32 %v2377, %v2381
    %vm2383 = vweird.f32 %v2366
    %vm2384 = vweird.f32 %v2377
    %vm2385 = vmor %vm2383, %vm2384
    %v2386 = vsel %vm2385, %v2377, %v2382
    %v2389 = vrot.slane %v2386, 7
    %vm2390 = vcmask 1040384
    %v2391 = vsel %vm2390, %v2376, %v2389
    %v2393 = vmul.f32 %v2364, %v2391
    %v2395 = vperm.slane %v2393, 0
    %v2396 = vperm.slane %v2393, 1
    %v2399 = vmul.f32 %v2256, %v2395
    %v2400 = vmul.f32 %v2257, %v2396
    %v2401 = vmul.f32 %v2258, %v2395
    %v2402 = vmul.f32 %v2259, %v2396
    %v2403 = vmul.f32 %v2260, %v2395
    %v2404 = vmul.f32 %v2261, %v2396
    %v2405 = vmul.f32 %v2262, %v2395
    %v2406 = vmul.f32 %v2263, %v2396
    %v2407 = vmul.f32 %v2264, %v2395
    %v2408 = vmul.f32 %v2265, %v2396
    %v2409 = vmul.f32 %v2266, %v2395
    %v2410 = vmul.f32 %v2267, %v2396
    %v2411 = vmul.f32 %v2268, %v2395
    %v2412 = vmul.f32 %v2269, %v2396
    %v2413 = vmul.f32 %v2270, %v2395
    %v2414 = vmul.f32 %v2271, %v2396
    %v2415 = vmul.f32 %v2272, %v2395
    %v2416 = vmul.f32 %v2273, %v2396
    %v2417 = vmul.f32 %v2274, %v2395
    %v2418 = vmul.f32 %v2275, %v2396
    %v2419 = vmul.f32 %v2276, %v2395
    %v2420 = vmul.f32 %v2277, %v2396
    %v2421 = vmul.f32 %v2278, %v2395
    %v2422 = vmul.f32 %v2279, %v2396
    %v2423 = vmul.f32 %v2280, %v2395
    %v2424 = vmul.f32 %v2281, %v2396
    %v2425 = vmul.f32 %v2282, %v2395
    %v2426 = vmul.f32 %v2283, %v2396
    %v2427 = vmul.f32 %v2284, %v2395
    %v2428 = vmul.f32 %v2285, %v2396
    %v2429 = vmul.f32 %v2286, %v2395
    %v2430 = vmul.f32 %v2287, %v2396
    %v2431 = vadd.f32 %v2399, %v2400
    %v2432 = vadd.f32 %v2401, %v2402
    %v2433 = vadd.f32 %v2403, %v2404
    %v2434 = vadd.f32 %v2405, %v2406
    %v2435 = vadd.f32 %v2407, %v2408
    %v2436 = vadd.f32 %v2409, %v2410
    %v2437 = vadd.f32 %v2411, %v2412
    %v2438 = vadd.f32 %v2413, %v2414
    %v2439 = vadd.f32 %v2415, %v2416
    %v2440 = vadd.f32 %v2417, %v2418
    %v2441 = vadd.f32 %v2419, %v2420
    %v2442 = vadd.f32 %v2421, %v2422
    %v2443 = vadd.f32 %v2423, %v2424
    %v2444 = vadd.f32 %v2425, %v2426
    %v2445 = vadd.f32 %v2427, %v2428
    %v2446 = vadd.f32 %v2429, %v2430
    %v2447 = vmax.f32 %v1199, %v1247
    %v2448 = vmax.f32 %v1200, %v1248
    %v2449 = vmax.f32 %v1201, %v1249
    %v2450 = vmax.f32 %v1202, %v1250
    %v2451 = vmax.f32 %v1203, %v1251
    %v2452 = vmax.f32 %v1204, %v1252
    %v2453 = vmax.f32 %v1205, %v1253
    %v2454 = vmax.f32 %v1206, %v1254
    %v2455 = vmax.f32 %v1207, %v1255
    %v2456 = vmax.f32 %v1208, %v1256
    %v2457 = vmax.f32 %v1209, %v1257
    %v2458 = vmax.f32 %v1210, %v1258
    %v2459 = vmax.f32 %v1211, %v1259
    %v2460 = vmax.f32 %v1212, %v1260
    %v2461 = vmax.f32 %v1213, %v1261
    %v2462 = vmax.f32 %v1214, %v1262
    %v2463 = vpack.c.bf16 %v2447, %v2447
    %v2464 = vpack.c.bf16 %v2448, %v2448
    %v2465 = vpack.c.bf16 %v2449, %v2449
    %v2466 = vpack.c.bf16 %v2450, %v2450
    %v2467 = vpack.c.bf16 %v2451, %v2451
    %v2468 = vpack.c.bf16 %v2452, %v2452
    %v2469 = vpack.c.bf16 %v2453, %v2453
    %v2470 = vpack.c.bf16 %v2454, %v2454
    %v2471 = vpack.c.bf16 %v2455, %v2455
    %v2472 = vpack.c.bf16 %v2456, %v2456
    %v2473 = vpack.c.bf16 %v2457, %v2457
    %v2474 = vpack.c.bf16 %v2458, %v2458
    %v2475 = vpack.c.bf16 %v2459, %v2459
    %v2476 = vpack.c.bf16 %v2460, %v2460
    %v2477 = vpack.c.bf16 %v2461, %v2461
    %v2478 = vpack.c.bf16 %v2462, %v2462
    %v2479 = vunpack.c.l.bf16 %v2463
    %v2480 = vunpack.c.l.bf16 %v2464
    %v2481 = vunpack.c.l.bf16 %v2465
    %v2482 = vunpack.c.l.bf16 %v2466
    %v2483 = vunpack.c.l.bf16 %v2467
    %v2484 = vunpack.c.l.bf16 %v2468
    %v2485 = vunpack.c.l.bf16 %v2469
    %v2486 = vunpack.c.l.bf16 %v2470
    %v2487 = vunpack.c.l.bf16 %v2471
    %v2488 = vunpack.c.l.bf16 %v2472
    %v2489 = vunpack.c.l.bf16 %v2473
    %v2490 = vunpack.c.l.bf16 %v2474
    %v2491 = vunpack.c.l.bf16 %v2475
    %v2492 = vunpack.c.l.bf16 %v2476
    %v2493 = vunpack.c.l.bf16 %v2477
    %v2494 = vunpack.c.l.bf16 %v2478
    %v2495 = vmax.f32 %v2479, %v1295
    %v2496 = vmax.f32 %v2480, %v1296
    %v2497 = vmax.f32 %v2481, %v1297
    %v2498 = vmax.f32 %v2482, %v1298
    %v2499 = vmax.f32 %v2483, %v1299
    %v2500 = vmax.f32 %v2484, %v1300
    %v2501 = vmax.f32 %v2485, %v1301
    %v2502 = vmax.f32 %v2486, %v1302
    %v2503 = vmax.f32 %v2487, %v1303
    %v2504 = vmax.f32 %v2488, %v1304
    %v2505 = vmax.f32 %v2489, %v1305
    %v2506 = vmax.f32 %v2490, %v1306
    %v2507 = vmax.f32 %v2491, %v1307
    %v2508 = vmax.f32 %v2492, %v1308
    %v2509 = vmax.f32 %v2493, %v1309
    %v2510 = vmax.f32 %v2494, %v1310
    %v2511 = vpack.c.bf16 %v2495, %v2495
    %v2512 = vpack.c.bf16 %v2496, %v2496
    %v2513 = vpack.c.bf16 %v2497, %v2497
    %v2514 = vpack.c.bf16 %v2498, %v2498
    %v2515 = vpack.c.bf16 %v2499, %v2499
    %v2516 = vpack.c.bf16 %v2500, %v2500
    %v2517 = vpack.c.bf16 %v2501, %v2501
    %v2518 = vpack.c.bf16 %v2502, %v2502
    %v2519 = vpack.c.bf16 %v2503, %v2503
    %v2520 = vpack.c.bf16 %v2504, %v2504
    %v2521 = vpack.c.bf16 %v2505, %v2505
    %v2522 = vpack.c.bf16 %v2506, %v2506
    %v2523 = vpack.c.bf16 %v2507, %v2507
    %v2524 = vpack.c.bf16 %v2508, %v2508
    %v2525 = vpack.c.bf16 %v2509, %v2509
    %v2526 = vpack.c.bf16 %v2510, %v2510
    %v2527 = vunpack.c.l.bf16 %v2511
    %v2528 = vunpack.c.l.bf16 %v2512
    %v2529 = vunpack.c.l.bf16 %v2513
    %v2530 = vunpack.c.l.bf16 %v2514
    %v2531 = vunpack.c.l.bf16 %v2515
    %v2532 = vunpack.c.l.bf16 %v2516
    %v2533 = vunpack.c.l.bf16 %v2517
    %v2534 = vunpack.c.l.bf16 %v2518
    %v2535 = vunpack.c.l.bf16 %v2519
    %v2536 = vunpack.c.l.bf16 %v2520
    %v2537 = vunpack.c.l.bf16 %v2521
    %v2538 = vunpack.c.l.bf16 %v2522
    %v2539 = vunpack.c.l.bf16 %v2523
    %v2540 = vunpack.c.l.bf16 %v2524
    %v2541 = vunpack.c.l.bf16 %v2525
    %v2542 = vunpack.c.l.bf16 %v2526
    %v2543 = vmax.f32 %v2527, %v1343
    %v2544 = vmax.f32 %v2528, %v1344
    %v2545 = vmax.f32 %v2529, %v1345
    %v2546 = vmax.f32 %v2530, %v1346
    %v2547 = vmax.f32 %v2531, %v1347
    %v2548 = vmax.f32 %v2532, %v1348
    %v2549 = vmax.f32 %v2533, %v1349
    %v2550 = vmax.f32 %v2534, %v1350
    %v2551 = vmax.f32 %v2535, %v1351
    %v2552 = vmax.f32 %v2536, %v1352
    %v2553 = vmax.f32 %v2537, %v1353
    %v2554 = vmax.f32 %v2538, %v1354
    %v2555 = vmax.f32 %v2539, %v1355
    %v2556 = vmax.f32 %v2540, %v1356
    %v2557 = vmax.f32 %v2541, %v1357
    %v2558 = vmax.f32 %v2542, %v1358
    %v2559 = vpack.c.bf16 %v2543, %v2543
    %v2560 = vpack.c.bf16 %v2544, %v2544
    %v2561 = vpack.c.bf16 %v2545, %v2545
    %v2562 = vpack.c.bf16 %v2546, %v2546
    %v2563 = vpack.c.bf16 %v2547, %v2547
    %v2564 = vpack.c.bf16 %v2548, %v2548
    %v2565 = vpack.c.bf16 %v2549, %v2549
    %v2566 = vpack.c.bf16 %v2550, %v2550
    %v2567 = vpack.c.bf16 %v2551, %v2551
    %v2568 = vpack.c.bf16 %v2552, %v2552
    %v2569 = vpack.c.bf16 %v2553, %v2553
    %v2570 = vpack.c.bf16 %v2554, %v2554
    %v2571 = vpack.c.bf16 %v2555, %v2555
    %v2572 = vpack.c.bf16 %v2556, %v2556
    %v2573 = vpack.c.bf16 %v2557, %v2557
    %v2574 = vpack.c.bf16 %v2558, %v2558
    %v2575 = vunpack.c.l.bf16 %v2559
    %v2576 = vunpack.c.l.bf16 %v2560
    %v2577 = vunpack.c.l.bf16 %v2561
    %v2578 = vunpack.c.l.bf16 %v2562
    %v2579 = vunpack.c.l.bf16 %v2563
    %v2580 = vunpack.c.l.bf16 %v2564
    %v2581 = vunpack.c.l.bf16 %v2565
    %v2582 = vunpack.c.l.bf16 %v2566
    %v2583 = vunpack.c.l.bf16 %v2567
    %v2584 = vunpack.c.l.bf16 %v2568
    %v2585 = vunpack.c.l.bf16 %v2569
    %v2586 = vunpack.c.l.bf16 %v2570
    %v2587 = vunpack.c.l.bf16 %v2571
    %v2588 = vunpack.c.l.bf16 %v2572
    %v2589 = vunpack.c.l.bf16 %v2573
    %v2590 = vunpack.c.l.bf16 %v2574
    %v2591 = vmax.f32 %v2575, %v1391
    %v2592 = vmax.f32 %v2576, %v1392
    %v2593 = vmax.f32 %v2577, %v1393
    %v2594 = vmax.f32 %v2578, %v1394
    %v2595 = vmax.f32 %v2579, %v1395
    %v2596 = vmax.f32 %v2580, %v1396
    %v2597 = vmax.f32 %v2581, %v1397
    %v2598 = vmax.f32 %v2582, %v1398
    %v2599 = vmax.f32 %v2583, %v1399
    %v2600 = vmax.f32 %v2584, %v1400
    %v2601 = vmax.f32 %v2585, %v1401
    %v2602 = vmax.f32 %v2586, %v1402
    %v2603 = vmax.f32 %v2587, %v1403
    %v2604 = vmax.f32 %v2588, %v1404
    %v2605 = vmax.f32 %v2589, %v1405
    %v2606 = vmax.f32 %v2590, %v1406
    %v2607 = vpack.c.bf16 %v2591, %v2591
    %v2608 = vpack.c.bf16 %v2592, %v2592
    %v2609 = vpack.c.bf16 %v2593, %v2593
    %v2610 = vpack.c.bf16 %v2594, %v2594
    %v2611 = vpack.c.bf16 %v2595, %v2595
    %v2612 = vpack.c.bf16 %v2596, %v2596
    %v2613 = vpack.c.bf16 %v2597, %v2597
    %v2614 = vpack.c.bf16 %v2598, %v2598
    %v2615 = vpack.c.bf16 %v2599, %v2599
    %v2616 = vpack.c.bf16 %v2600, %v2600
    %v2617 = vpack.c.bf16 %v2601, %v2601
    %v2618 = vpack.c.bf16 %v2602, %v2602
    %v2619 = vpack.c.bf16 %v2603, %v2603
    %v2620 = vpack.c.bf16 %v2604, %v2604
    %v2621 = vpack.c.bf16 %v2605, %v2605
    %v2622 = vpack.c.bf16 %v2606, %v2606
    %v2623 = vunpack.c.l.bf16 %v2607
    %v2624 = vunpack.c.l.bf16 %v2608
    %v2625 = vunpack.c.l.bf16 %v2609
    %v2626 = vunpack.c.l.bf16 %v2610
    %v2627 = vunpack.c.l.bf16 %v2611
    %v2628 = vunpack.c.l.bf16 %v2612
    %v2629 = vunpack.c.l.bf16 %v2613
    %v2630 = vunpack.c.l.bf16 %v2614
    %v2631 = vunpack.c.l.bf16 %v2615
    %v2632 = vunpack.c.l.bf16 %v2616
    %v2633 = vunpack.c.l.bf16 %v2617
    %v2634 = vunpack.c.l.bf16 %v2618
    %v2635 = vunpack.c.l.bf16 %v2619
    %v2636 = vunpack.c.l.bf16 %v2620
    %v2637 = vunpack.c.l.bf16 %v2621
    %v2638 = vunpack.c.l.bf16 %v2622
    %v2639 = vmax.f32 %v2623, %v1439
    %v2640 = vmax.f32 %v2624, %v1440
    %v2641 = vmax.f32 %v2625, %v1441
    %v2642 = vmax.f32 %v2626, %v1442
    %v2643 = vmax.f32 %v2627, %v1443
    %v2644 = vmax.f32 %v2628, %v1444
    %v2645 = vmax.f32 %v2629, %v1445
    %v2646 = vmax.f32 %v2630, %v1446
    %v2647 = vmax.f32 %v2631, %v1447
    %v2648 = vmax.f32 %v2632, %v1448
    %v2649 = vmax.f32 %v2633, %v1449
    %v2650 = vmax.f32 %v2634, %v1450
    %v2651 = vmax.f32 %v2635, %v1451
    %v2652 = vmax.f32 %v2636, %v1452
    %v2653 = vmax.f32 %v2637, %v1453
    %v2654 = vmax.f32 %v2638, %v1454
    %v2655 = vpack.c.bf16 %v2639, %v2639
    %v2656 = vpack.c.bf16 %v2640, %v2640
    %v2657 = vpack.c.bf16 %v2641, %v2641
    %v2658 = vpack.c.bf16 %v2642, %v2642
    %v2659 = vpack.c.bf16 %v2643, %v2643
    %v2660 = vpack.c.bf16 %v2644, %v2644
    %v2661 = vpack.c.bf16 %v2645, %v2645
    %v2662 = vpack.c.bf16 %v2646, %v2646
    %v2663 = vpack.c.bf16 %v2647, %v2647
    %v2664 = vpack.c.bf16 %v2648, %v2648
    %v2665 = vpack.c.bf16 %v2649, %v2649
    %v2666 = vpack.c.bf16 %v2650, %v2650
    %v2667 = vpack.c.bf16 %v2651, %v2651
    %v2668 = vpack.c.bf16 %v2652, %v2652
    %v2669 = vpack.c.bf16 %v2653, %v2653
    %v2670 = vpack.c.bf16 %v2654, %v2654
    %v2671 = vunpack.c.l.bf16 %v2655
    %v2672 = vunpack.c.l.bf16 %v2656
    %v2673 = vunpack.c.l.bf16 %v2657
    %v2674 = vunpack.c.l.bf16 %v2658
    %v2675 = vunpack.c.l.bf16 %v2659
    %v2676 = vunpack.c.l.bf16 %v2660
    %v2677 = vunpack.c.l.bf16 %v2661
    %v2678 = vunpack.c.l.bf16 %v2662
    %v2679 = vunpack.c.l.bf16 %v2663
    %v2680 = vunpack.c.l.bf16 %v2664
    %v2681 = vunpack.c.l.bf16 %v2665
    %v2682 = vunpack.c.l.bf16 %v2666
    %v2683 = vunpack.c.l.bf16 %v2667
    %v2684 = vunpack.c.l.bf16 %v2668
    %v2685 = vunpack.c.l.bf16 %v2669
    %v2686 = vunpack.c.l.bf16 %v2670
    %v2687 = vmax.f32 %v2671, %v1200
    %v2688 = vmax.f32 %v2672, %v1201
    %v2689 = vmax.f32 %v2673, %v1202
    %v2690 = vmax.f32 %v2674, %v1203
    %v2691 = vmax.f32 %v2675, %v1204
    %v2692 = vmax.f32 %v2676, %v1205
    %v2693 = vmax.f32 %v2677, %v1206
    %v2694 = vmax.f32 %v2678, %v1487
    %v2695 = vmax.f32 %v2679, %v1208
    %v2696 = vmax.f32 %v2680, %v1209
    %v2697 = vmax.f32 %v2681, %v1210
    %v2698 = vmax.f32 %v2682, %v1211
    %v2699 = vmax.f32 %v2683, %v1212
    %v2700 = vmax.f32 %v2684, %v1213
    %v2701 = vmax.f32 %v2685, %v1214
    %v2702 = vmax.f32 %v2686, %v1488
    %v2703 = vpack.c.bf16 %v2687, %v2687
    %v2704 = vpack.c.bf16 %v2688, %v2688
    %v2705 = vpack.c.bf16 %v2689, %v2689
    %v2706 = vpack.c.bf16 %v2690, %v2690
    %v2707 = vpack.c.bf16 %v2691, %v2691
    %v2708 = vpack.c.bf16 %v2692, %v2692
    %v2709 = vpack.c.bf16 %v2693, %v2693
    %v2710 = vpack.c.bf16 %v2694, %v2694
    %v2711 = vpack.c.bf16 %v2695, %v2695
    %v2712 = vpack.c.bf16 %v2696, %v2696
    %v2713 = vpack.c.bf16 %v2697, %v2697
    %v2714 = vpack.c.bf16 %v2698, %v2698
    %v2715 = vpack.c.bf16 %v2699, %v2699
    %v2716 = vpack.c.bf16 %v2700, %v2700
    %v2717 = vpack.c.bf16 %v2701, %v2701
    %v2718 = vpack.c.bf16 %v2702, %v2702
    %v2719 = vunpack.c.l.bf16 %v2703
    %v2720 = vunpack.c.l.bf16 %v2704
    %v2721 = vunpack.c.l.bf16 %v2705
    %v2722 = vunpack.c.l.bf16 %v2706
    %v2723 = vunpack.c.l.bf16 %v2707
    %v2724 = vunpack.c.l.bf16 %v2708
    %v2725 = vunpack.c.l.bf16 %v2709
    %v2726 = vunpack.c.l.bf16 %v2710
    %v2727 = vunpack.c.l.bf16 %v2711
    %v2728 = vunpack.c.l.bf16 %v2712
    %v2729 = vunpack.c.l.bf16 %v2713
    %v2730 = vunpack.c.l.bf16 %v2714
    %v2731 = vunpack.c.l.bf16 %v2715
    %v2732 = vunpack.c.l.bf16 %v2716
    %v2733 = vunpack.c.l.bf16 %v2717
    %v2734 = vunpack.c.l.bf16 %v2718
    %v2735 = vmax.f32 %v2719, %v1248
    %v2736 = vmax.f32 %v2720, %v1249
    %v2737 = vmax.f32 %v2721, %v1250
    %v2738 = vmax.f32 %v2722, %v1251
    %v2739 = vmax.f32 %v2723, %v1252
    %v2740 = vmax.f32 %v2724, %v1253
    %v2741 = vmax.f32 %v2725, %v1254
    %v2742 = vmax.f32 %v2726, %v1493
    %v2743 = vmax.f32 %v2727, %v1256
    %v2744 = vmax.f32 %v2728, %v1257
    %v2745 = vmax.f32 %v2729, %v1258
    %v2746 = vmax.f32 %v2730, %v1259
    %v2747 = vmax.f32 %v2731, %v1260
    %v2748 = vmax.f32 %v2732, %v1261
    %v2749 = vmax.f32 %v2733, %v1262
    %v2750 = vmax.f32 %v2734, %v1494
    %v2751 = vpack.c.bf16 %v2735, %v2735
    %v2752 = vpack.c.bf16 %v2736, %v2736
    %v2753 = vpack.c.bf16 %v2737, %v2737
    %v2754 = vpack.c.bf16 %v2738, %v2738
    %v2755 = vpack.c.bf16 %v2739, %v2739
    %v2756 = vpack.c.bf16 %v2740, %v2740
    %v2757 = vpack.c.bf16 %v2741, %v2741
    %v2758 = vpack.c.bf16 %v2742, %v2742
    %v2759 = vpack.c.bf16 %v2743, %v2743
    %v2760 = vpack.c.bf16 %v2744, %v2744
    %v2761 = vpack.c.bf16 %v2745, %v2745
    %v2762 = vpack.c.bf16 %v2746, %v2746
    %v2763 = vpack.c.bf16 %v2747, %v2747
    %v2764 = vpack.c.bf16 %v2748, %v2748
    %v2765 = vpack.c.bf16 %v2749, %v2749
    %v2766 = vpack.c.bf16 %v2750, %v2750
    %v2767 = vunpack.c.l.bf16 %v2751
    %v2768 = vunpack.c.l.bf16 %v2752
    %v2769 = vunpack.c.l.bf16 %v2753
    %v2770 = vunpack.c.l.bf16 %v2754
    %v2771 = vunpack.c.l.bf16 %v2755
    %v2772 = vunpack.c.l.bf16 %v2756
    %v2773 = vunpack.c.l.bf16 %v2757
    %v2774 = vunpack.c.l.bf16 %v2758
    %v2775 = vunpack.c.l.bf16 %v2759
    %v2776 = vunpack.c.l.bf16 %v2760
    %v2777 = vunpack.c.l.bf16 %v2761
    %v2778 = vunpack.c.l.bf16 %v2762
    %v2779 = vunpack.c.l.bf16 %v2763
    %v2780 = vunpack.c.l.bf16 %v2764
    %v2781 = vunpack.c.l.bf16 %v2765
    %v2782 = vunpack.c.l.bf16 %v2766
    %v2783 = vmax.f32 %v2767, %v1296
    %v2784 = vmax.f32 %v2768, %v1297
    %v2785 = vmax.f32 %v2769, %v1298
    %v2786 = vmax.f32 %v2770, %v1299
    %v2787 = vmax.f32 %v2771, %v1300
    %v2788 = vmax.f32 %v2772, %v1301
    %v2789 = vmax.f32 %v2773, %v1302
    %v2790 = vmax.f32 %v2774, %v1499
    %v2791 = vmax.f32 %v2775, %v1304
    %v2792 = vmax.f32 %v2776, %v1305
    %v2793 = vmax.f32 %v2777, %v1306
    %v2794 = vmax.f32 %v2778, %v1307
    %v2795 = vmax.f32 %v2779, %v1308
    %v2796 = vmax.f32 %v2780, %v1309
    %v2797 = vmax.f32 %v2781, %v1310
    %v2798 = vmax.f32 %v2782, %v1500
    %v2799 = vpack.c.bf16 %v2783, %v2783
    %v2800 = vpack.c.bf16 %v2784, %v2784
    %v2801 = vpack.c.bf16 %v2785, %v2785
    %v2802 = vpack.c.bf16 %v2786, %v2786
    %v2803 = vpack.c.bf16 %v2787, %v2787
    %v2804 = vpack.c.bf16 %v2788, %v2788
    %v2805 = vpack.c.bf16 %v2789, %v2789
    %v2806 = vpack.c.bf16 %v2790, %v2790
    %v2807 = vpack.c.bf16 %v2791, %v2791
    %v2808 = vpack.c.bf16 %v2792, %v2792
    %v2809 = vpack.c.bf16 %v2793, %v2793
    %v2810 = vpack.c.bf16 %v2794, %v2794
    %v2811 = vpack.c.bf16 %v2795, %v2795
    %v2812 = vpack.c.bf16 %v2796, %v2796
    %v2813 = vpack.c.bf16 %v2797, %v2797
    %v2814 = vpack.c.bf16 %v2798, %v2798
    %v2815 = vunpack.c.l.bf16 %v2799
    %v2816 = vunpack.c.l.bf16 %v2800
    %v2817 = vunpack.c.l.bf16 %v2801
    %v2818 = vunpack.c.l.bf16 %v2802
    %v2819 = vunpack.c.l.bf16 %v2803
    %v2820 = vunpack.c.l.bf16 %v2804
    %v2821 = vunpack.c.l.bf16 %v2805
    %v2822 = vunpack.c.l.bf16 %v2806
    %v2823 = vunpack.c.l.bf16 %v2807
    %v2824 = vunpack.c.l.bf16 %v2808
    %v2825 = vunpack.c.l.bf16 %v2809
    %v2826 = vunpack.c.l.bf16 %v2810
    %v2827 = vunpack.c.l.bf16 %v2811
    %v2828 = vunpack.c.l.bf16 %v2812
    %v2829 = vunpack.c.l.bf16 %v2813
    %v2830 = vunpack.c.l.bf16 %v2814
    %v2831 = vsel %vm1909, %v2815, 0.0
    %v2832 = vsel %vm1909, %v2816, 0.0
    %v2833 = vadd.f32 %v2831, %v2832
    %v2834 = vsel %vm1909, %v2817, 0.0
    %v2835 = vadd.f32 %v2833, %v2834
    %v2836 = vsel %vm1909, %v2818, 0.0
    %v2837 = vadd.f32 %v2835, %v2836
    %v2838 = vsel %vm1909, %v2819, 0.0
    %v2839 = vadd.f32 %v2837, %v2838
    %v2840 = vsel %vm1909, %v2820, 0.0
    %v2841 = vadd.f32 %v2839, %v2840
    %v2842 = vsel %vm1909, %v2821, 0.0
    %v2843 = vadd.f32 %v2841, %v2842
    %v2844 = vsel %vm1909, %v2822, 0.0
    %v2845 = vadd.f32 %v2843, %v2844
    %v2846 = vsel %vm1909, %v2823, 0.0
    %v2847 = vadd.f32 %v2845, %v2846
    %v2848 = vsel %vm1909, %v2824, 0.0
    %v2849 = vadd.f32 %v2847, %v2848
    %v2850 = vsel %vm1909, %v2825, 0.0
    %v2851 = vadd.f32 %v2849, %v2850
    %v2852 = vsel %vm1909, %v2826, 0.0
    %v2853 = vadd.f32 %v2851, %v2852
    %v2854 = vsel %vm1909, %v2827, 0.0
    %v2855 = vadd.f32 %v2853, %v2854
    %v2856 = vsel %vm1909, %v2828, 0.0
    %v2857 = vadd.f32 %v2855, %v2856
    %v2858 = vsel %vm1909, %v2829, 0.0
    %v2859 = vadd.f32 %v2857, %v2858
    %v2860 = vsel %vm1909, %v2830, 0.0
    %v2861 = vadd.f32 %v2859, %v2860
    %v2862 = vrot.slane %v2861, 4
    %v2863 = vadd.f32 %v2861, %v2862
    %v2864 = vrot.slane %v2863, 2
    %v2865 = vadd.f32 %v2863, %v2864
    %v2866 = vrot.slane %v2865, 1
    %v2867 = vadd.f32 %v2865, %v2866
    %v2868 = vmul.f32 %v2867, %v2253
    %v2869 = vsub.f32 %v2815, %v2868
    %v2870 = vsub.f32 %v2816, %v2868
    %v2871 = vsub.f32 %v2817, %v2868
    %v2872 = vsub.f32 %v2818, %v2868
    %v2873 = vsub.f32 %v2819, %v2868
    %v2874 = vsub.f32 %v2820, %v2868
    %v2875 = vsub.f32 %v2821, %v2868
    %v2876 = vsub.f32 %v2822, %v2868
    %v2877 = vsub.f32 %v2823, %v2868
    %v2878 = vsub.f32 %v2824, %v2868
    %v2879 = vsub.f32 %v2825, %v2868
    %v2880 = vsub.f32 %v2826, %v2868
    %v2881 = vsub.f32 %v2827, %v2868
    %v2882 = vsub.f32 %v2828, %v2868
    %v2883 = vsub.f32 %v2829, %v2868
    %v2884 = vsub.f32 %v2830, %v2868
    %v2885 = vmul.f32 %v2869, %v2869
    %v2886 = vmul.f32 %v2870, %v2870
    %v2887 = vmul.f32 %v2871, %v2871
    %v2888 = vmul.f32 %v2872, %v2872
    %v2889 = vmul.f32 %v2873, %v2873
    %v2890 = vmul.f32 %v2874, %v2874
    %v2891 = vmul.f32 %v2875, %v2875
    %v2892 = vmul.f32 %v2876, %v2876
    %v2893 = vmul.f32 %v2877, %v2877
    %v2894 = vmul.f32 %v2878, %v2878
    %v2895 = vmul.f32 %v2879, %v2879
    %v2896 = vmul.f32 %v2880, %v2880
    %v2897 = vmul.f32 %v2881, %v2881
    %v2898 = vmul.f32 %v2882, %v2882
    %v2899 = vmul.f32 %v2883, %v2883
    %v2900 = vmul.f32 %v2884, %v2884
    %v2901 = vsel %vm1909, %v2885, 0.0
    %v2902 = vsel %vm1909, %v2886, 0.0
    %v2903 = vadd.f32 %v2901, %v2902
    %v2904 = vsel %vm1909, %v2887, 0.0
    %v2905 = vadd.f32 %v2903, %v2904
    %v2906 = vsel %vm1909, %v2888, 0.0
    %v2907 = vadd.f32 %v2905, %v2906
    %v2908 = vsel %vm1909, %v2889, 0.0
    %v2909 = vadd.f32 %v2907, %v2908
    %v2910 = vsel %vm1909, %v2890, 0.0
    %v2911 = vadd.f32 %v2909, %v2910
    %v2912 = vsel %vm1909, %v2891, 0.0
    %v2913 = vadd.f32 %v2911, %v2912
    %v2914 = vsel %vm1909, %v2892, 0.0
    %v2915 = vadd.f32 %v2913, %v2914
    %v2916 = vsel %vm1909, %v2893, 0.0
    %v2917 = vadd.f32 %v2915, %v2916
    %v2918 = vsel %vm1909, %v2894, 0.0
    %v2919 = vadd.f32 %v2917, %v2918
    %v2920 = vsel %vm1909, %v2895, 0.0
    %v2921 = vadd.f32 %v2919, %v2920
    %v2922 = vsel %vm1909, %v2896, 0.0
    %v2923 = vadd.f32 %v2921, %v2922
    %v2924 = vsel %vm1909, %v2897, 0.0
    %v2925 = vadd.f32 %v2923, %v2924
    %v2926 = vsel %vm1909, %v2898, 0.0
    %v2927 = vadd.f32 %v2925, %v2926
    %v2928 = vsel %vm1909, %v2899, 0.0
    %v2929 = vadd.f32 %v2927, %v2928
    %v2930 = vsel %vm1909, %v2900, 0.0
    %v2931 = vadd.f32 %v2929, %v2930
    %v2932 = vrot.slane %v2931, 4
    %v2933 = vadd.f32 %v2931, %v2932
    %v2934 = vrot.slane %v2933, 2
    %v2935 = vadd.f32 %v2933, %v2934
    %v2936 = vrot.slane %v2935, 1
    %v2937 = vadd.f32 %v2935, %v2936
    %v2938 = vmul.f32 %v2937, %v2253
    %s2939 = sld [smem:[#allocation2 + $0x1]]
    %v2940 = vstv %s2939
    %v2941 = vmul.f32 %v2940, %v2869
    %v2942 = vmul.f32 %v2940, %v2870
    %v2943 = vmul.f32 %v2940, %v2871
    %v2944 = vmul.f32 %v2940, %v2872
    %v2945 = vmul.f32 %v2940, %v2873
    %v2946 = vmul.f32 %v2940, %v2874
    %v2947 = vmul.f32 %v2940, %v2875
    %v2948 = vmul.f32 %v2940, %v2876
    %v2949 = vmul.f32 %v2940, %v2877
    %v2950 = vmul.f32 %v2940, %v2878
    %v2951 = vmul.f32 %v2940, %v2879
    %v2952 = vmul.f32 %v2940, %v2880
    %v2953 = vmul.f32 %v2940, %v2881
    %v2954 = vmul.f32 %v2940, %v2882
    %v2955 = vmul.f32 %v2940, %v2883
    %v2956 = vmul.f32 %v2940, %v2884
    %v2957 = vadd.f32 %v2938, 1e-05
    %v2958 = vrsqrt.pop %v2957
    %v2959 = vmul.f32 %v2958, %v2957
    %v2960 = vmul.f32 %v2959, %v2958
    %v2961 = vmul.f32 0.5, %v2960
    %v2962 = vsub.f32 1.5, %v2961
    %v2963 = vmul.f32 %v2958, %v2962
    %vm2964 = vweird.f32 %v2957
    %vm2965 = vweird.f32 %v2958
    %vm2966 = vmor %vm2964, %vm2965
    %v2967 = vsel %vm2966, %v2958, %v2963
    %v2968 = vmul.f32 %v2941, %v2967
    %v2969 = vmul.f32 %v2942, %v2967
    %v2970 = vmul.f32 %v2943, %v2967
    %v2971 = vmul.f32 %v2944, %v2967
    %v2972 = vmul.f32 %v2945, %v2967
    %v2973 = vmul.f32 %v2946, %v2967
    %v2974 = vmul.f32 %v2947, %v2967
    %v2975 = vmul.f32 %v2948, %v2967
    %v2976 = vmul.f32 %v2949, %v2967
    %v2977 = vmul.f32 %v2950, %v2967
    %v2978 = vmul.f32 %v2951, %v2967
    %v2979 = vmul.f32 %v2952, %v2967
    %v2980 = vmul.f32 %v2953, %v2967
    %v2981 = vmul.f32 %v2954, %v2967
    %v2982 = vmul.f32 %v2955, %v2967
    %v2983 = vmul.f32 %v2956, %v2967
    %v2984 = vadd.f32 %v2431, %v2968
    %v2985 = vadd.f32 %v2432, %v2969
    %v2986 = vadd.f32 %v2433, %v2970
    %v2987 = vadd.f32 %v2434, %v2971
    %v2988 = vadd.f32 %v2435, %v2972
    %v2989 = vadd.f32 %v2436, %v2973
    %v2990 = vadd.f32 %v2437, %v2974
    %v2991 = vadd.f32 %v2438, %v2975
    %v2992 = vadd.f32 %v2439, %v2976
    %v2993 = vadd.f32 %v2440, %v2977
    %v2994 = vadd.f32 %v2441, %v2978
    %v2995 = vadd.f32 %v2442, %v2979
    %v2996 = vadd.f32 %v2443, %v2980
    %v2997 = vadd.f32 %v2444, %v2981
    %v2998 = vadd.f32 %v2445, %v2982
    %v2999 = vadd.f32 %v2446, %v2983
    %3000 = vst.msk [vmem:[%s7] sm:$0xff] %vm1909, %v2984
    %3001 = vst.msk [vmem:[%s7 + $0x8] sm:$0xff] %vm1909, %v2985
    %3002 = vst.msk [vmem:[%s7 + $0x10] sm:$0xff] %vm1909, %v2986
    %3003 = vst.msk [vmem:[%s7 + $0x18] sm:$0xff] %vm1909, %v2987
    %3004 = vst.msk [vmem:[%s7 + $0x20] sm:$0xff] %vm1909, %v2988
    %3005 = vst.msk [vmem:[%s7 + $0x28] sm:$0xff] %vm1909, %v2989
    %3006 = vst.msk [vmem:[%s7 + $0x30] sm:$0xff] %vm1909, %v2990
    %3007 = vst.msk [vmem:[%s7 + $0x38] sm:$0xff] %vm1909, %v2991
    %3008 = vst.msk [vmem:[%s7 + $0x40] sm:$0xff] %vm1909, %v2992
    %3009 = vst.msk [vmem:[%s7 + $0x48] sm:$0xff] %vm1909, %v2993
    %3010 = vst.msk [vmem:[%s7 + $0x50] sm:$0xff] %vm1909, %v2994
    %3011 = vst.msk [vmem:[%s7 + $0x58] sm:$0xff] %vm1909, %v2995
    %3012 = vst.msk [vmem:[%s7 + $0x60] sm:$0xff] %vm1909, %v2996
    %3013 = vst.msk [vmem:[%s7 + $0x68] sm:$0xff] %vm1909, %v2997
    %3014 = vst.msk [vmem:[%s7 + $0x70] sm:$0xff] %vm1909, %v2998
    %3015 = vst.msk [vmem:[%s7 + $0x78] sm:$0xff] %vm1909, %v2999
    // Predicated region
    $region34: #{mixed_op_pallas.1} parent=1 // pred_check
      _
    $region35: #{mixed_op_pallas.1} parent=1 // pred_check_branch
      %3017 = sbr.rel (0) target = $region37
    $region36: #{mixed_op_pallas.1} parent=1 // pred_region
      _
    $region37: #{mixed_op_pallas.1} parent=1 // pred_fallthru
      _
    // Predicated region
    $region38: #{mixed_op_pallas.1} parent=1 // pred_check
      _
    $region39: #{mixed_op_pallas.1} parent=1 // pred_check_branch
      %3019 = sbr.rel (0) target = $region41
    $region40: #{mixed_op_pallas.1} parent=1 // pred_region
      _
    $region41: #{mixed_op_pallas.1} parent=1 // pred_fallthru
      _
    %3020 = vsyncpa [#allocation3], 1

</llo_original>
